<compile_context>
chip_gen: v6e
topology: v6e:2x2x1
jax: 0.10.0
libtpu: 0.0.40
codegen_flags: <defaults>
</compile_context>

<pallas_src>
import functools

import jax
import jax.numpy as jnp
import numpy as np
from jax import lax
from jax.experimental import pallas as pl
from jax.experimental.pallas import tpu as pltpu


def _vicreg_kernel(x_ref, y_ref, repr_ref, cov_ref, std_ref,
                   gx_ref, gy_ref, sx_ref, sy_ref, ssx_ref, ssy_ref, cr_ref,
                   *, n_total):
    i = pl.program_id(0)
    nsteps = pl.num_programs(0)
    tn, d = x_ref.shape

    inv_n = jnp.float32(1.0 / n_total)
    inv_nm1 = jnp.float32(1.0 / (n_total - 1))
    inv_nm1_sq = jnp.float32(1.0 / float(n_total - 1) ** 2)
    inv_nd = jnp.float32(1.0 / (n_total * d))
    inv_d = jnp.float32(1.0 / d)
    n_f = jnp.float32(n_total)

    # ---- zero all resident accumulators on the first grid step ------------
    @pl.when(i == 0)
    def _():
        gx_ref[...] = jnp.zeros_like(gx_ref)
        gy_ref[...] = jnp.zeros_like(gy_ref)
        sx_ref[...] = jnp.zeros_like(sx_ref)
        sy_ref[...] = jnp.zeros_like(sy_ref)
        ssx_ref[...] = jnp.zeros_like(ssx_ref)
        ssy_ref[...] = jnp.zeros_like(ssy_ref)
        cr_ref[...] = jnp.zeros_like(cr_ref)

    x = x_ref[...].astype(jnp.float32)
    y = y_ref[...].astype(jnp.float32)

    needs_mask = (n_total % tn) != 0  # static Python bool
    if needs_mask:
        row = i * tn + lax.broadcasted_iota(jnp.int32, (tn, 1), 0)
        valid = row < n_total
        x = jnp.where(valid, x, 0.0)
        y = jnp.where(valid, y, 0.0)

    # F.normalize(dim=1): rows scaled by rsqrt of their squared norm.
    eps2 = jnp.float32(1e-24)  # (1e-12)^2, matches torch's eps on the norm
    xn = x * lax.rsqrt(jnp.maximum(jnp.sum(x * x, axis=1, keepdims=True), eps2))
    yn = y * lax.rsqrt(jnp.maximum(jnp.sum(y * y, axis=1, keepdims=True), eps2))

    # ---- single-pass column moments + cross term (VPU / XLU) --------------
    sx_ref[...] += jnp.sum(xn, axis=0, keepdims=True)
    sy_ref[...] += jnp.sum(yn, axis=0, keepdims=True)
    ssx_ref[...] += jnp.sum(xn * xn, axis=0, keepdims=True)
    ssy_ref[...] += jnp.sum(yn * yn, axis=0, keepdims=True)
    cr_ref[...] += jnp.sum(xn * yn, axis=0, keepdims=True)

    # ---- uncentered Gram on the MXU: bf16 operands, f32 accumulation ------
    # Contraction over the batch dim (transposed-LHS form); TODO(synk): verify
    # via pl.lower_as_mlir that this lowers without a per-tile XLU transpose.
    xb = xn.astype(jnp.bfloat16)
    yb = yn.astype(jnp.bfloat16)
    contract_batch = (((0,), (0,)), ((), ()))
    gx_ref[...] += lax.dot_general(xb, xb, contract_batch,
                                   preferred_element_type=jnp.float32)
    gy_ref[...] += lax.dot_general(yb, yb, contract_batch,
                                   preferred_element_type=jnp.float32)

    # ---- finalize on the last grid step ------------------------------------
    @pl.when(i == nsteps - 1)
    def _():
        ssx = ssx_ref[...]
        ssy = ssy_ref[...]
        mean_x = sx_ref[...] * inv_n
        mean_y = sy_ref[...] * inv_n
        var_x = jnp.maximum((ssx - n_f * mean_x * mean_x) * inv_nm1, 0.0)
        var_y = jnp.maximum((ssy - n_f * mean_y * mean_y) * inv_nm1, 0.0)

        # repr_loss = mean((xn - yn)^2) via the per-column cross term.
        repr_ref[...] = (jnp.sum(ssx + ssy - 2.0 * cr_ref[...], keepdims=True)
                         * inv_nd)

        std_x = jnp.sqrt(var_x + jnp.float32(1e-4))
        std_y = jnp.sqrt(var_y + jnp.float32(1e-4))
        std_ref[...] = (jnp.sum(jnp.maximum(1.0 - std_x, 0.0), keepdims=True)
                        + jnp.sum(jnp.maximum(1.0 - std_y, 0.0), keepdims=True)
                        ) * (jnp.float32(0.5) * inv_d)

        # cov = diag(1/std0) (G - N m m^T) diag(1/std0) / (N-1), std0 without
        # eps (exactly the reference's divide by x.std(dim=0); zero-variance
        # columns therefore produce inf/NaN just like the torch module).
        inv_std_x = lax.rsqrt(var_x)
        inv_std_y = lax.rsqrt(var_y)
        w_x = inv_std_x * inv_std_x          # 1 / var
        w_y = inv_std_y * inv_std_y
        matvec = (((1,), (0,)), ((), ()))    # (1,D) @ (D,D) -> (1,D)

        def off_diag_sq(g_ref, mean, var, w):
            # sum_ij C^2 = w (G∘G) w^T - 2N u G u^T + N^2 (sum m^2 w)^2
            g = g_ref[...]
            u = mean * w
            t1r = lax.dot_general(w, g * g, matvec,
                                  preferred_element_type=jnp.float32)
            t1 = jnp.sum(t1r * w, keepdims=True)
            t2r = lax.dot_general(u, g, matvec,
                                  preferred_element_type=jnp.float32)
            t2 = jnp.sum(t2r * u, keepdims=True)
            t3 = jnp.sum(mean * u, keepdims=True)
            frob = (t1 - 2.0 * n_f * t2 + (n_f * n_f) * t3 * t3) * inv_nm1_sq
            diag = var * w                   # diag(cov); == 1 where var > 0
            return frob - jnp.sum(diag * diag, keepdims=True)

        cov_ref[...] = (off_diag_sq(gx_ref, mean_x, var_x, w_x)
                        + off_diag_sq(gy_ref, mean_y, var_y, w_y)) * inv_d


def _device_vmem_bytes():
    try:
        return int(pltpu.get_tpu_info().vmem_capacity_bytes)
    except Exception:
        return 64 << 20  # conservative fallback: v7x per-TensorCore VMEM


def _pick_batch_tile(n, d, itemsize, tile_budget_bytes):
    """Largest batch tile (<=512 rows, multiple of 8) whose double-buffered
    streaming footprint fits the budget; targets >=256-deep MXU contraction on
    v6e/v7x whenever the Gram scratch leaves room."""
    if n <= 512:
        return n
    per_row = 2 * 2 * d * itemsize          # 2 inputs x 2 pipeline buffers
    cap = (tile_budget_bytes // max(per_row, 1)) // 8 * 8
    cap = int(max(8, min(512, cap)))
    return min(n, cap)


@jax.jit
def vicreg_loss(x, y):
    """Returns (repr_loss, cov_loss, std_loss) as f32 scalars."""
    assert x.shape == y.shape and x.ndim == 2
    n, d = x.shape
    itemsize = jnp.dtype(x.dtype).itemsize
    device_vmem = _device_vmem_bytes()

    # Resident accumulators: two DxD Grams + ~one DxD epilogue temporary +
    # five (1,D) moment rows (each padded to an (8, 128k) f32 tile).
    gram_bytes = 3 * d * d * 4
    vec_bytes = 5 * 8 * (((d + 127) // 128) * 128) * 4
    # TODO(synk): for D large enough that the DxD Gram alone approaches VMEM
    # (D >~ 2.3k on v7x's 64 MiB), tile the covariance into column blocks via
    # an extra grid axis (re-streaming X per block) instead of a bigger limit.

    tile_budget = int(0.85 * device_vmem) - gram_bytes - vec_bytes - (2 << 20)
    tn = _pick_batch_tile(n, d, itemsize, max(tile_budget, 1 << 20))
    nsteps = pl.cdiv(n, tn)

    # Deepen input pipelining when the phase is mem-bound and VMEM has room.
    use_buf3 = (nsteps >= 3
                and tile_budget >= 2 * 3 * tn * d * itemsize + (1 << 20))
    spec_kwargs = {"pipeline_mode": pl.Buffered(3)} if use_buf3 else {}
    in_spec = pl.BlockSpec((tn, d), lambda i: (i, 0), **spec_kwargs)

    n_buffers = 3 if use_buf3 else 2
    vmem_needed = (gram_bytes + vec_bytes
                   + 2 * n_buffers * tn * d * itemsize + (2 << 20))
    # Always set the scoped-VMEM limit explicitly (v5e default is only 16 MiB)
    # and clamp it to the physical per-core capacity (64 MiB on v7x).
    vmem_limit = int(min(0.9 * device_vmem, max(2 * vmem_needed, 32 << 20)))

    kernel = functools.partial(_vicreg_kernel, n_total=n)

    grid_spec = pltpu.PrefetchScalarGridSpec(
        num_scalar_prefetch=0,
        grid=(nsteps,),
        in_specs=[in_spec, in_spec],
        out_specs=(pl.BlockSpec((1, 1), lambda i: (0, 0)),
                   pl.BlockSpec((1, 1), lambda i: (0, 0)),
                   pl.BlockSpec((1, 1), lambda i: (0, 0))),
        scratch_shapes=[
            pltpu.VMEM((d, d), jnp.float32),   # Gram of xn
            pltpu.VMEM((d, d), jnp.float32),   # Gram of yn
            pltpu.VMEM((1, d), jnp.float32),   # col-sum xn
            pltpu.VMEM((1, d), jnp.float32),   # col-sum yn
            pltpu.VMEM((1, d), jnp.float32),   # col-sum xn^2
            pltpu.VMEM((1, d), jnp.float32),   # col-sum yn^2
            pltpu.VMEM((1, d), jnp.float32),   # col-sum xn*yn (repr cross term)
        ],
    )

    outs = pl.pallas_call(
        kernel,
        out_shape=(jax.ShapeDtypeStruct((1, 1), jnp.float32),   # repr_loss
                   jax.ShapeDtypeStruct((1, 1), jnp.float32),   # cov_loss
                   jax.ShapeDtypeStruct((1, 1), jnp.float32)),  # std_loss
        grid_spec=grid_spec,
        compiler_params=pltpu.CompilerParams(
            dimension_semantics=("arbitrary",),
            vmem_limit_bytes=vmem_limit),
    )(x, y)  # no wrapper-side astype: narrow dtypes stream straight to VMEM
    repr_loss, cov_loss, std_loss = (o[0, 0] for o in outs)
    return repr_loss, cov_loss, std_loss


def _vicreg_ref(x, y):
    """Pure-numpy reference mirroring the PyTorch forward."""
    x = np.asarray(x, np.float32)
    y = np.asarray(y, np.float32)
    N, D = x.shape
    xn = x / np.maximum(np.linalg.norm(x, axis=1, keepdims=True), 1e-12)
    yn = y / np.maximum(np.linalg.norm(y, axis=1, keepdims=True), 1e-12)
    repr_loss = np.mean((xn - yn) ** 2)
    xc = xn - xn.mean(0, keepdims=True)
    yc = yn - yn.mean(0, keepdims=True)
    var_x = xc.var(0, ddof=1)
    var_y = yc.var(0, ddof=1)
    std_x = np.sqrt(var_x + 1e-4)
    std_y = np.sqrt(var_y + 1e-4)
    std_loss = np.mean(np.maximum(1 - std_x, 0)) / 2 + np.mean(np.maximum(1 - std_y, 0)) / 2
    xs = (xc - xc.mean(0, keepdims=True)) / xc.std(0, ddof=1)
    ys = (yc - yc.mean(0, keepdims=True)) / yc.std(0, ddof=1)
    cov_x = xs.T @ xs / (N - 1)
    cov_y = ys.T @ ys / (N - 1)
    off = lambda c: (c ** 2).sum() - (np.diag(c) ** 2).sum()
    cov_loss = off(cov_x) / D + off(cov_y) / D
    return repr_loss, cov_loss, std_loss


if __name__ == "__main__":
    N, D = 8, 32  # small batch of feature vectors (batch, features)
    key = jax.random.PRNGKey(0)
    kx, ky = jax.random.split(key)
    x = jax.random.normal(kx, (N, D), dtype=jnp.float32)
    y = jax.random.normal(ky, (N, D), dtype=jnp.float32)

    repr_loss, cov_loss, std_loss = vicreg_loss(x, y)
    jax.block_until_ready((repr_loss, cov_loss, std_loss))

    ref = _vicreg_ref(np.asarray(x), np.asarray(y))
    got = (float(repr_loss), float(cov_loss), float(std_loss))
    np.testing.assert_allclose(got, ref, rtol=1e-2, atol=1e-3)

    print("KERNEL_OK")
</pallas_src>

<mosaic_0001>
module attributes {stable_mosaic.version = 11 : i64} {
  func.func @_vicreg_kernel(%arg0: i32, %arg1: memref<8x32xf32, #tpu.memory_space<vmem>>, %arg2: memref<8x32xf32, #tpu.memory_space<vmem>>, %arg3: memref<1x1xf32, #tpu.memory_space<vmem>>, %arg4: memref<1x1xf32, #tpu.memory_space<vmem>>, %arg5: memref<1x1xf32, #tpu.memory_space<vmem>>, %arg6: memref<32x32xf32, #tpu.memory_space<vmem>>, %arg7: memref<32x32xf32, #tpu.memory_space<vmem>>, %arg8: memref<1x32xf32, #tpu.memory_space<vmem>>, %arg9: memref<1x32xf32, #tpu.memory_space<vmem>>, %arg10: memref<1x32xf32, #tpu.memory_space<vmem>>, %arg11: memref<1x32xf32, #tpu.memory_space<vmem>>, %arg12: memref<1x32xf32, #tpu.memory_space<vmem>>) attributes {dimension_semantics = [#tpu.dimension_semantics<arbitrary>], iteration_bounds = array<i64: 1>, scalar_prefetch = 0 : i64, scratch_operands = 7 : i64, tpu.core_type = #tpu.core_type<tc>, window_params = [{transform_indices = @transform_0, window_bounds = array<i64: 8, 32>}, {transform_indices = @transform_1, window_bounds = array<i64: 8, 32>}, {pipeline_mode = #tpu.pipeline_mode<synchronous>, transform_indices = @transform_2, window_bounds = array<i64: 1, 1>}, {pipeline_mode = #tpu.pipeline_mode<synchronous>, transform_indices = @transform_3, window_bounds = array<i64: 1, 1>}, {pipeline_mode = #tpu.pipeline_mode<synchronous>, transform_indices = @transform_4, window_bounds = array<i64: 1, 1>}]} {
    %c0_i32 = arith.constant 0 : i32
    %0 = arith.cmpi eq, %arg0, %c0_i32 : i32
    %1 = arith.extui %0 : i1 to i32
    %c0_i32_0 = arith.constant 0 : i32
    %2 = arith.cmpi ne, %1, %c0_i32_0 : i32
    scf.if %2 {
      %cst_50 = arith.constant 0.000000e+00 : f32
      %62 = vector.broadcast %cst_50 : f32 to vector<32x32xf32>
      %c0_51 = arith.constant 0 : index
      %c0_52 = arith.constant 0 : index
      %63 = vector.load %arg6[%c0_51, %c0_52] : memref<32x32xf32, #tpu.memory_space<vmem>>, vector<32x32xf32>
      tpu.vector_store %arg6[%c0_51, %c0_52], %62 {strides = array<i32>} : memref<32x32xf32, #tpu.memory_space<vmem>>, vector<32x32xf32>,
      %cst_53 = arith.constant 0.000000e+00 : f32
      %64 = vector.broadcast %cst_53 : f32 to vector<32x32xf32>
      %c0_54 = arith.constant 0 : index
      %c0_55 = arith.constant 0 : index
      %65 = vector.load %arg7[%c0_54, %c0_55] : memref<32x32xf32, #tpu.memory_space<vmem>>, vector<32x32xf32>
      tpu.vector_store %arg7[%c0_54, %c0_55], %64 {strides = array<i32>} : memref<32x32xf32, #tpu.memory_space<vmem>>, vector<32x32xf32>,
      %cst_56 = arith.constant 0.000000e+00 : f32
      %66 = vector.broadcast %cst_56 : f32 to vector<1x32xf32>
      %c0_57 = arith.constant 0 : index
      %c0_58 = arith.constant 0 : index
      %67 = vector.load %arg8[%c0_57, %c0_58] : memref<1x32xf32, #tpu.memory_space<vmem>>, vector<1x32xf32>
      tpu.vector_store %arg8[%c0_57, %c0_58], %66 {strides = array<i32>} : memref<1x32xf32, #tpu.memory_space<vmem>>, vector<1x32xf32>,
      %cst_59 = arith.constant 0.000000e+00 : f32
      %68 = vector.broadcast %cst_59 : f32 to vector<1x32xf32>
      %c0_60 = arith.constant 0 : index
      %c0_61 = arith.constant 0 : index
      %69 = vector.load %arg9[%c0_60, %c0_61] : memref<1x32xf32, #tpu.memory_space<vmem>>, vector<1x32xf32>
      tpu.vector_store %arg9[%c0_60, %c0_61], %68 {strides = array<i32>} : memref<1x32xf32, #tpu.memory_space<vmem>>, vector<1x32xf32>,
      %cst_62 = arith.constant 0.000000e+00 : f32
      %70 = vector.broadcast %cst_62 : f32 to vector<1x32xf32>
      %c0_63 = arith.constant 0 : index
      %c0_64 = arith.constant 0 : index
      %71 = vector.load %arg10[%c0_63, %c0_64] : memref<1x32xf32, #tpu.memory_space<vmem>>, vector<1x32xf32>
      tpu.vector_store %arg10[%c0_63, %c0_64], %70 {strides = array<i32>} : memref<1x32xf32, #tpu.memory_space<vmem>>, vector<1x32xf32>,
      %cst_65 = arith.constant 0.000000e+00 : f32
      %72 = vector.broadcast %cst_65 : f32 to vector<1x32xf32>
      %c0_66 = arith.constant 0 : index
      %c0_67 = arith.constant 0 : index
      %73 = vector.load %arg11[%c0_66, %c0_67] : memref<1x32xf32, #tpu.memory_space<vmem>>, vector<1x32xf32>
      tpu.vector_store %arg11[%c0_66, %c0_67], %72 {strides = array<i32>} : memref<1x32xf32, #tpu.memory_space<vmem>>, vector<1x32xf32>,
      %cst_68 = arith.constant 0.000000e+00 : f32
      %74 = vector.broadcast %cst_68 : f32 to vector<1x32xf32>
      %c0_69 = arith.constant 0 : index
      %c0_70 = arith.constant 0 : index
      %75 = vector.load %arg12[%c0_69, %c0_70] : memref<1x32xf32, #tpu.memory_space<vmem>>, vector<1x32xf32>
      tpu.vector_store %arg12[%c0_69, %c0_70], %74 {strides = array<i32>} : memref<1x32xf32, #tpu.memory_space<vmem>>, vector<1x32xf32>,
    } else {
    }
    %c0 = arith.constant 0 : index
    %c0_1 = arith.constant 0 : index
    %3 = vector.load %arg1[%c0, %c0_1] : memref<8x32xf32, #tpu.memory_space<vmem>>, vector<8x32xf32>
    %c0_2 = arith.constant 0 : index
    %c0_3 = arith.constant 0 : index
    %4 = vector.load %arg2[%c0_2, %c0_3] : memref<8x32xf32, #tpu.memory_space<vmem>>, vector<8x32xf32>
    %5 = arith.mulf %3, %3 : vector<8x32xf32>
    %cst = arith.constant dense<0.000000e+00> : vector<8xf32>
    %6 = vector.multi_reduction <add>, %5, %cst [1] : vector<8x32xf32> to vector<8xf32>
    %7 = vector.shape_cast %6 : vector<8xf32> to vector<8x1xf32>
    %cst_4 = arith.constant 1.000000e-24 : f32
    %8 = vector.broadcast %cst_4 : f32 to vector<8x1xf32>
    %9 = arith.maximumf %7, %8 : vector<8x1xf32>
    %10 = math.rsqrt %9 : vector<8x1xf32>
    %11 = vector.broadcast %10 : vector<8x1xf32> to vector<8x32xf32>
    %12 = arith.mulf %3, %11 : vector<8x32xf32>
    %13 = arith.mulf %4, %4 : vector<8x32xf32>
    %cst_5 = arith.constant dense<0.000000e+00> : vector<8xf32>
    %14 = vector.multi_reduction <add>, %13, %cst_5 [1] : vector<8x32xf32> to vector<8xf32>
    %15 = vector.shape_cast %14 : vector<8xf32> to vector<8x1xf32>
    %cst_6 = arith.constant 1.000000e-24 : f32
    %16 = vector.broadcast %cst_6 : f32 to vector<8x1xf32>
    %17 = arith.maximumf %15, %16 : vector<8x1xf32>
    %18 = math.rsqrt %17 : vector<8x1xf32>
    %19 = vector.broadcast %18 : vector<8x1xf32> to vector<8x32xf32>
    %20 = arith.mulf %4, %19 : vector<8x32xf32>
    %c0_7 = arith.constant 0 : index
    %c0_8 = arith.constant 0 : index
    %21 = vector.load %arg8[%c0_7, %c0_8] : memref<1x32xf32, #tpu.memory_space<vmem>>, vector<1x32xf32>
    %cst_9 = arith.constant dense<0.000000e+00> : vector<32xf32>
    %22 = vector.multi_reduction <add>, %12, %cst_9 [0] : vector<8x32xf32> to vector<32xf32>
    %23 = vector.shape_cast %22 : vector<32xf32> to vector<1x32xf32>
    %24 = arith.addf %21, %23 : vector<1x32xf32>
    %c0_10 = arith.constant 0 : index
    %c0_11 = arith.constant 0 : index
    %25 = vector.load %arg8[%c0_10, %c0_11] : memref<1x32xf32, #tpu.memory_space<vmem>>, vector<1x32xf32>
    tpu.vector_store %arg8[%c0_10, %c0_11], %24 {strides = array<i32>} : memref<1x32xf32, #tpu.memory_space<vmem>>, vector<1x32xf32>,
    %c0_12 = arith.constant 0 : index
    %c0_13 = arith.constant 0 : index
    %26 = vector.load %arg9[%c0_12, %c0_13] : memref<1x32xf32, #tpu.memory_space<vmem>>, vector<1x32xf32>
    %cst_14 = arith.constant dense<0.000000e+00> : vector<32xf32>
    %27 = vector.multi_reduction <add>, %20, %cst_14 [0] : vector<8x32xf32> to vector<32xf32>
    %28 = vector.shape_cast %27 : vector<32xf32> to vector<1x32xf32>
    %29 = arith.addf %26, %28 : vector<1x32xf32>
    %c0_15 = arith.constant 0 : index
    %c0_16 = arith.constant 0 : index
    %30 = vector.load %arg9[%c0_15, %c0_16] : memref<1x32xf32, #tpu.memory_space<vmem>>, vector<1x32xf32>
    tpu.vector_store %arg9[%c0_15, %c0_16], %29 {strides = array<i32>} : memref<1x32xf32, #tpu.memory_space<vmem>>, vector<1x32xf32>,
    %c0_17 = arith.constant 0 : index
    %c0_18 = arith.constant 0 : index
    %31 = vector.load %arg10[%c0_17, %c0_18] : memref<1x32xf32, #tpu.memory_space<vmem>>, vector<1x32xf32>
    %32 = arith.mulf %12, %12 : vector<8x32xf32>
    %cst_19 = arith.constant dense<0.000000e+00> : vector<32xf32>
    %33 = vector.multi_reduction <add>, %32, %cst_19 [0] : vector<8x32xf32> to vector<32xf32>
    %34 = vector.shape_cast %33 : vector<32xf32> to vector<1x32xf32>
    %35 = arith.addf %31, %34 : vector<1x32xf32>
    %c0_20 = arith.constant 0 : index
    %c0_21 = arith.constant 0 : index
    %36 = vector.load %arg10[%c0_20, %c0_21] : memref<1x32xf32, #tpu.memory_space<vmem>>, vector<1x32xf32>
    tpu.vector_store %arg10[%c0_20, %c0_21], %35 {strides = array<i32>} : memref<1x32xf32, #tpu.memory_space<vmem>>, vector<1x32xf32>,
    %c0_22 = arith.constant 0 : index
    %c0_23 = arith.constant 0 : index
    %37 = vector.load %arg11[%c0_22, %c0_23] : memref<1x32xf32, #tpu.memory_space<vmem>>, vector<1x32xf32>
    %38 = arith.mulf %20, %20 : vector<8x32xf32>
    %cst_24 = arith.constant dense<0.000000e+00> : vector<32xf32>
    %39 = vector.multi_reduction <add>, %38, %cst_24 [0] : vector<8x32xf32> to vector<32xf32>
    %40 = vector.shape_cast %39 : vector<32xf32> to vector<1x32xf32>
    %41 = arith.addf %37, %40 : vector<1x32xf32>
    %c0_25 = arith.constant 0 : index
    %c0_26 = arith.constant 0 : index
    %42 = vector.load %arg11[%c0_25, %c0_26] : memref<1x32xf32, #tpu.memory_space<vmem>>, vector<1x32xf32>
    tpu.vector_store %arg11[%c0_25, %c0_26], %41 {strides = array<i32>} : memref<1x32xf32, #tpu.memory_space<vmem>>, vector<1x32xf32>,
    %c0_27 = arith.constant 0 : index
    %c0_28 = arith.constant 0 : index
    %43 = vector.load %arg12[%c0_27, %c0_28] : memref<1x32xf32, #tpu.memory_space<vmem>>, vector<1x32xf32>
    %44 = arith.mulf %12, %20 : vector<8x32xf32>
    %cst_29 = arith.constant dense<0.000000e+00> : vector<32xf32>
    %45 = vector.multi_reduction <add>, %44, %cst_29 [0] : vector<8x32xf32> to vector<32xf32>
    %46 = vector.shape_cast %45 : vector<32xf32> to vector<1x32xf32>
    %47 = arith.addf %43, %46 : vector<1x32xf32>
    %c0_30 = arith.constant 0 : index
    %c0_31 = arith.constant 0 : index
    %48 = vector.load %arg12[%c0_30, %c0_31] : memref<1x32xf32, #tpu.memory_space<vmem>>, vector<1x32xf32>
    tpu.vector_store %arg12[%c0_30, %c0_31], %47 {strides = array<i32>} : memref<1x32xf32, #tpu.memory_space<vmem>>, vector<1x32xf32>,
    %49 = arith.truncf %12 : vector<8x32xf32> to vector<8x32xbf16>
    %50 = arith.truncf %20 : vector<8x32xf32> to vector<8x32xbf16>
    %c0_32 = arith.constant 0 : index
    %c0_33 = arith.constant 0 : index
    %51 = vector.load %arg6[%c0_32, %c0_33] : memref<32x32xf32, #tpu.memory_space<vmem>>, vector<32x32xf32>
    %cst_34 = arith.constant dense<0.000000e+00> : vector<32x32xf32>
    %52 = tpu.matmul %49, %49, %cst_34 {dimension_numbers = #tpu.dot_dimension_numbers<[0], [0], [1], [1], [0, 1, 1, 1], [], []>} : vector<8x32xbf16>, vector<8x32xbf16>, vector<32x32xf32> -> vector<32x32xf32>
    %53 = arith.addf %51, %52 : vector<32x32xf32>
    %c0_35 = arith.constant 0 : index
    %c0_36 = arith.constant 0 : index
    %54 = vector.load %arg6[%c0_35, %c0_36] : memref<32x32xf32, #tpu.memory_space<vmem>>, vector<32x32xf32>
    tpu.vector_store %arg6[%c0_35, %c0_36], %53 {strides = array<i32>} : memref<32x32xf32, #tpu.memory_space<vmem>>, vector<32x32xf32>,
    %c0_37 = arith.constant 0 : index
    %c0_38 = arith.constant 0 : index
    %55 = vector.load %arg7[%c0_37, %c0_38] : memref<32x32xf32, #tpu.memory_space<vmem>>, vector<32x32xf32>
    %cst_39 = arith.constant dense<0.000000e+00> : vector<32x32xf32>
    %56 = tpu.matmul %50, %50, %cst_39 {dimension_numbers = #tpu.dot_dimension_numbers<[0], [0], [1], [1], [0, 1, 1, 1], [], []>} : vector<8x32xbf16>, vector<8x32xbf16>, vector<32x32xf32> -> vector<32x32xf32>
    %57 = arith.addf %55, %56 : vector<32x32xf32>
    %c0_40 = arith.constant 0 : index
    %c0_41 = arith.constant 0 : index
    %58 = vector.load %arg7[%c0_40, %c0_41] : memref<32x32xf32, #tpu.memory_space<vmem>>, vector<32x32xf32>
    tpu.vector_store %arg7[%c0_40, %c0_41], %57 {strides = array<i32>} : memref<32x32xf32, #tpu.memory_space<vmem>>, vector<32x32xf32>,
    %c0_i32_42 = arith.constant 0 : i32
    %59 = arith.cmpi eq, %arg0, %c0_i32_42 : i32
    %60 = arith.extui %59 : i1 to i32
    %cst_43 = arith.constant 1.250000e-01 : f32
    %cst_44 = arith.constant 8.000000e+00 : f32
    %cst_45 = arith.constant 0.142857149 : f32
    %cst_46 = arith.constant 3.906250e-03 : f32
    %cst_47 = arith.constant 3.125000e-02 : f32
    %cst_48 = arith.constant 0.0204081628 : f32
    %c0_i32_49 = arith.constant 0 : i32
    %61 = arith.cmpi ne, %60, %c0_i32_49 : i32
    scf.if %61 {
      %c0_50 = arith.constant 0 : index
      %c0_51 = arith.constant 0 : index
      %62 = vector.load %arg10[%c0_50, %c0_51] : memref<1x32xf32, #tpu.memory_space<vmem>>, vector<1x32xf32>
      %c0_52 = arith.constant 0 : index
      %c0_53 = arith.constant 0 : index
      %63 = vector.load %arg11[%c0_52, %c0_53] : memref<1x32xf32, #tpu.memory_space<vmem>>, vector<1x32xf32>
      %c0_54 = arith.constant 0 : index
      %c0_55 = arith.constant 0 : index
      %64 = vector.load %arg8[%c0_54, %c0_55] : memref<1x32xf32, #tpu.memory_space<vmem>>, vector<1x32xf32>
      %65 = vector.broadcast %cst_43 : f32 to vector<1x32xf32>
      %66 = arith.mulf %64, %65 : vector<1x32xf32>
      %c0_56 = arith.constant 0 : index
      %c0_57 = arith.constant 0 : index
      %67 = vector.load %arg9[%c0_56, %c0_57] : memref<1x32xf32, #tpu.memory_space<vmem>>, vector<1x32xf32>
      %68 = vector.broadcast %cst_43 : f32 to vector<1x32xf32>
      %69 = arith.mulf %67, %68 : vector<1x32xf32>
      %70 = vector.broadcast %cst_44 : f32 to vector<1x32xf32>
      %71 = arith.mulf %70, %66 : vector<1x32xf32>
      %72 = arith.mulf %71, %66 : vector<1x32xf32>
      %73 = arith.subf %62, %72 : vector<1x32xf32>
      %74 = vector.broadcast %cst_45 : f32 to vector<1x32xf32>
      %75 = arith.mulf %73, %74 : vector<1x32xf32>
      %cst_58 = arith.constant 0.000000e+00 : f32
      %76 = vector.broadcast %cst_58 : f32 to vector<1x32xf32>
      %77 = arith.maximumf %75, %76 : vector<1x32xf32>
      %78 = vector.broadcast %cst_44 : f32 to vector<1x32xf32>
      %79 = arith.mulf %78, %69 : vector<1x32xf32>
      %80 = arith.mulf %79, %69 : vector<1x32xf32>
      %81 = arith.subf %63, %80 : vector<1x32xf32>
      %82 = vector.broadcast %cst_45 : f32 to vector<1x32xf32>
      %83 = arith.mulf %81, %82 : vector<1x32xf32>
      %cst_59 = arith.constant 0.000000e+00 : f32
      %84 = vector.broadcast %cst_59 : f32 to vector<1x32xf32>
      %85 = arith.maximumf %83, %84 : vector<1x32xf32>
      %86 = arith.addf %62, %63 : vector<1x32xf32>
      %c0_60 = arith.constant 0 : index
      %c0_61 = arith.constant 0 : index
      %87 = vector.load %arg12[%c0_60, %c0_61] : memref<1x32xf32, #tpu.memory_space<vmem>>, vector<1x32xf32>
      %cst_62 = arith.constant 2.000000e+00 : f32
      %88 = vector.broadcast %cst_62 : f32 to vector<1x32xf32>
      %89 = arith.mulf %88, %87 : vector<1x32xf32>
      %90 = arith.subf %86, %89 : vector<1x32xf32>
      %91 = vector.shape_cast %90 : vector<1x32xf32> to vector<1x1x32xf32>
      %cst_63 = arith.constant dense<0.000000e+00> : vector<1xf32>
      %92 = vector.multi_reduction <add>, %91, %cst_63 [1, 2] : vector<1x1x32xf32> to vector<1xf32>
      %93 = vector.shape_cast %92 : vector<1xf32> to vector<1x1x1xf32>
      %94 = vector.extract %93[0, 0, 0] : f32 from vector<1x1x1xf32>
      %95 = vector.broadcast %94 : f32 to vector<1x1xf32>
      %96 = vector.broadcast %cst_46 : f32 to vector<1x1xf32>
      %97 = arith.mulf %95, %96 : vector<1x1xf32>
      %c0_64 = arith.constant 0 : index
      %c0_65 = arith.constant 0 : index
      %98 = vector.load %arg3[%c0_64, %c0_65] : memref<1x1xf32, #tpu.memory_space<vmem>>, vector<1x1xf32>
      tpu.vector_store %arg3[%c0_64, %c0_65], %97 {strides = array<i32>} : memref<1x1xf32, #tpu.memory_space<vmem>>, vector<1x1xf32>,
      %cst_66 = arith.constant 9.99999974E-5 : f32
      %99 = vector.broadcast %cst_66 : f32 to vector<1x32xf32>
      %100 = arith.addf %77, %99 : vector<1x32xf32>
      %101 = math.sqrt %100 : vector<1x32xf32>
      %cst_67 = arith.constant 9.99999974E-5 : f32
      %102 = vector.broadcast %cst_67 : f32 to vector<1x32xf32>
      %103 = arith.addf %85, %102 : vector<1x32xf32>
      %104 = math.sqrt %103 : vector<1x32xf32>
      %cst_68 = arith.constant 1.000000e+00 : f32
      %105 = vector.broadcast %cst_68 : f32 to vector<1x32xf32>
      %106 = arith.subf %105, %101 : vector<1x32xf32>
      %cst_69 = arith.constant 0.000000e+00 : f32
      %107 = vector.broadcast %cst_69 : f32 to vector<1x32xf32>
      %108 = arith.maximumf %106, %107 : vector<1x32xf32>
      %109 = vector.shape_cast %108 : vector<1x32xf32> to vector<1x1x32xf32>
      %cst_70 = arith.constant dense<0.000000e+00> : vector<1xf32>
      %110 = vector.multi_reduction <add>, %109, %cst_70 [1, 2] : vector<1x1x32xf32> to vector<1xf32>
      %111 = vector.shape_cast %110 : vector<1xf32> to vector<1x1x1xf32>
      %112 = vector.extract %111[0, 0, 0] : f32 from vector<1x1x1xf32>
      %113 = vector.broadcast %112 : f32 to vector<1x1xf32>
      %cst_71 = arith.constant 1.000000e+00 : f32
      %114 = vector.broadcast %cst_71 : f32 to vector<1x32xf32>
      %115 = arith.subf %114, %104 : vector<1x32xf32>
      %cst_72 = arith.constant 0.000000e+00 : f32
      %116 = vector.broadcast %cst_72 : f32 to vector<1x32xf32>
      %117 = arith.maximumf %115, %116 : vector<1x32xf32>
      %118 = vector.shape_cast %117 : vector<1x32xf32> to vector<1x1x32xf32>
      %cst_73 = arith.constant dense<0.000000e+00> : vector<1xf32>
      %119 = vector.multi_reduction <add>, %118, %cst_73 [1, 2] : vector<1x1x32xf32> to vector<1xf32>
      %120 = vector.shape_cast %119 : vector<1xf32> to vector<1x1x1xf32>
      %121 = vector.extract %120[0, 0, 0] : f32 from vector<1x1x1xf32>
      %122 = vector.broadcast %121 : f32 to vector<1x1xf32>
      %123 = arith.addf %113, %122 : vector<1x1xf32>
      %cst_74 = arith.constant 5.000000e-01 : f32
      %124 = arith.mulf %cst_74, %cst_47 : f32
      %125 = vector.broadcast %124 : f32 to vector<1x1xf32>
      %126 = arith.mulf %123, %125 : vector<1x1xf32>
      %c0_75 = arith.constant 0 : index
      %c0_76 = arith.constant 0 : index
      %127 = vector.load %arg5[%c0_75, %c0_76] : memref<1x1xf32, #tpu.memory_space<vmem>>, vector<1x1xf32>
      tpu.vector_store %arg5[%c0_75, %c0_76], %126 {strides = array<i32>} : memref<1x1xf32, #tpu.memory_space<vmem>>, vector<1x1xf32>,
      %128 = math.rsqrt %77 : vector<1x32xf32>
      %129 = math.rsqrt %85 : vector<1x32xf32>
      %130 = arith.mulf %128, %128 : vector<1x32xf32>
      %131 = arith.mulf %129, %129 : vector<1x32xf32>
      %c0_77 = arith.constant 0 : index
      %c0_78 = arith.constant 0 : index
      %132 = vector.load %arg6[%c0_77, %c0_78] : memref<32x32xf32, #tpu.memory_space<vmem>>, vector<32x32xf32>
      %133 = arith.mulf %66, %130 : vector<1x32xf32>
      %134 = arith.mulf %132, %132 : vector<32x32xf32>
      %cst_79 = arith.constant dense<0.000000e+00> : vector<1x32xf32>
      %135 = tpu.matmul %130, %134, %cst_79 {dimension_numbers = #tpu.dot_dimension_numbers<[1], [0], [0], [1], [0, 0, 1, 1], [], []>} : vector<1x32xf32>, vector<32x32xf32>, vector<1x32xf32> -> vector<1x32xf32>
      %136 = arith.mulf %135, %130 : vector<1x32xf32>
      %137 = vector.shape_cast %136 : vector<1x32xf32> to vector<1x1x32xf32>
      %cst_80 = arith.constant dense<0.000000e+00> : vector<1xf32>
      %138 = vector.multi_reduction <add>, %137, %cst_80 [1, 2] : vector<1x1x32xf32> to vector<1xf32>
      %139 = vector.shape_cast %138 : vector<1xf32> to vector<1x1x1xf32>
      %140 = vector.extract %139[0, 0, 0] : f32 from vector<1x1x1xf32>
      %141 = vector.broadcast %140 : f32 to vector<1x1xf32>
      %cst_81 = arith.constant dense<0.000000e+00> : vector<1x32xf32>
      %142 = tpu.matmul %133, %132, %cst_81 {dimension_numbers = #tpu.dot_dimension_numbers<[1], [0], [0], [1], [0, 0, 1, 1], [], []>} : vector<1x32xf32>, vector<32x32xf32>, vector<1x32xf32> -> vector<1x32xf32>
      %143 = arith.mulf %142, %133 : vector<1x32xf32>
      %144 = vector.shape_cast %143 : vector<1x32xf32> to vector<1x1x32xf32>
      %cst_82 = arith.constant dense<0.000000e+00> : vector<1xf32>
      %145 = vector.multi_reduction <add>, %144, %cst_82 [1, 2] : vector<1x1x32xf32> to vector<1xf32>
      %146 = vector.shape_cast %145 : vector<1xf32> to vector<1x1x1xf32>
      %147 = vector.extract %146[0, 0, 0] : f32 from vector<1x1x1xf32>
      %148 = vector.broadcast %147 : f32 to vector<1x1xf32>
      %149 = arith.mulf %66, %133 : vector<1x32xf32>
      %150 = vector.shape_cast %149 : vector<1x32xf32> to vector<1x1x32xf32>
      %cst_83 = arith.constant dense<0.000000e+00> : vector<1xf32>
      %151 = vector.multi_reduction <add>, %150, %cst_83 [1, 2] : vector<1x1x32xf32> to vector<1xf32>
      %152 = vector.shape_cast %151 : vector<1xf32> to vector<1x1x1xf32>
      %153 = vector.extract %152[0, 0, 0] : f32 from vector<1x1x1xf32>
      %154 = vector.broadcast %153 : f32 to vector<1x1xf32>
      %cst_84 = arith.constant 2.000000e+00 : f32
      %155 = arith.mulf %cst_84, %cst_44 : f32
      %156 = vector.broadcast %155 : f32 to vector<1x1xf32>
      %157 = arith.mulf %156, %148 : vector<1x1xf32>
      %158 = arith.subf %141, %157 : vector<1x1xf32>
      %159 = arith.mulf %cst_44, %cst_44 : f32
      %160 = vector.broadcast %159 : f32 to vector<1x1xf32>
      %161 = arith.mulf %160, %154 : vector<1x1xf32>
      %162 = arith.mulf %161, %154 : vector<1x1xf32>
      %163 = arith.addf %158, %162 : vector<1x1xf32>
      %164 = vector.broadcast %cst_48 : f32 to vector<1x1xf32>
      %165 = arith.mulf %163, %164 : vector<1x1xf32>
      %166 = arith.mulf %77, %130 : vector<1x32xf32>
      %167 = arith.mulf %166, %166 : vector<1x32xf32>
      %168 = vector.shape_cast %167 : vector<1x32xf32> to vector<1x1x32xf32>
      %cst_85 = arith.constant dense<0.000000e+00> : vector<1xf32>
      %169 = vector.multi_reduction <add>, %168, %cst_85 [1, 2] : vector<1x1x32xf32> to vector<1xf32>
      %170 = vector.shape_cast %169 : vector<1xf32> to vector<1x1x1xf32>
      %171 = vector.extract %170[0, 0, 0] : f32 from vector<1x1x1xf32>
      %172 = vector.broadcast %171 : f32 to vector<1x1xf32>
      %173 = arith.subf %165, %172 : vector<1x1xf32>
      %c0_86 = arith.constant 0 : index
      %c0_87 = arith.constant 0 : index
      %174 = vector.load %arg7[%c0_86, %c0_87] : memref<32x32xf32, #tpu.memory_space<vmem>>, vector<32x32xf32>
      %175 = arith.mulf %69, %131 : vector<1x32xf32>
      %176 = arith.mulf %174, %174 : vector<32x32xf32>
      %cst_88 = arith.constant dense<0.000000e+00> : vector<1x32xf32>
      %177 = tpu.matmul %131, %176, %cst_88 {dimension_numbers = #tpu.dot_dimension_numbers<[1], [0], [0], [1], [0, 0, 1, 1], [], []>} : vector<1x32xf32>, vector<32x32xf32>, vector<1x32xf32> -> vector<1x32xf32>
      %178 = arith.mulf %177, %131 : vector<1x32xf32>
      %179 = vector.shape_cast %178 : vector<1x32xf32> to vector<1x1x32xf32>
      %cst_89 = arith.constant dense<0.000000e+00> : vector<1xf32>
      %180 = vector.multi_reduction <add>, %179, %cst_89 [1, 2] : vector<1x1x32xf32> to vector<1xf32>
      %181 = vector.shape_cast %180 : vector<1xf32> to vector<1x1x1xf32>
      %182 = vector.extract %181[0, 0, 0] : f32 from vector<1x1x1xf32>
      %183 = vector.broadcast %182 : f32 to vector<1x1xf32>
      %cst_90 = arith.constant dense<0.000000e+00> : vector<1x32xf32>
      %184 = tpu.matmul %175, %174, %cst_90 {dimension_numbers = #tpu.dot_dimension_numbers<[1], [0], [0], [1], [0, 0, 1, 1], [], []>} : vector<1x32xf32>, vector<32x32xf32>, vector<1x32xf32> -> vector<1x32xf32>
      %185 = arith.mulf %184, %175 : vector<1x32xf32>
      %186 = vector.shape_cast %185 : vector<1x32xf32> to vector<1x1x32xf32>
      %cst_91 = arith.constant dense<0.000000e+00> : vector<1xf32>
      %187 = vector.multi_reduction <add>, %186, %cst_91 [1, 2] : vector<1x1x32xf32> to vector<1xf32>
      %188 = vector.shape_cast %187 : vector<1xf32> to vector<1x1x1xf32>
      %189 = vector.extract %188[0, 0, 0] : f32 from vector<1x1x1xf32>
      %190 = vector.broadcast %189 : f32 to vector<1x1xf32>
      %191 = arith.mulf %69, %175 : vector<1x32xf32>
      %192 = vector.shape_cast %191 : vector<1x32xf32> to vector<1x1x32xf32>
      %cst_92 = arith.constant dense<0.000000e+00> : vector<1xf32>
      %193 = vector.multi_reduction <add>, %192, %cst_92 [1, 2] : vector<1x1x32xf32> to vector<1xf32>
      %194 = vector.shape_cast %193 : vector<1xf32> to vector<1x1x1xf32>
      %195 = vector.extract %194[0, 0, 0] : f32 from vector<1x1x1xf32>
      %196 = vector.broadcast %195 : f32 to vector<1x1xf32>
      %cst_93 = arith.constant 2.000000e+00 : f32
      %197 = arith.mulf %cst_93, %cst_44 : f32
      %198 = vector.broadcast %197 : f32 to vector<1x1xf32>
      %199 = arith.mulf %198, %190 : vector<1x1xf32>
      %200 = arith.subf %183, %199 : vector<1x1xf32>
      %201 = arith.mulf %cst_44, %cst_44 : f32
      %202 = vector.broadcast %201 : f32 to vector<1x1xf32>
      %203 = arith.mulf %202, %196 : vector<1x1xf32>
      %204 = arith.mulf %203, %196 : vector<1x1xf32>
      %205 = arith.addf %200, %204 : vector<1x1xf32>
      %206 = vector.broadcast %cst_48 : f32 to vector<1x1xf32>
      %207 = arith.mulf %205, %206 : vector<1x1xf32>
      %208 = arith.mulf %85, %131 : vector<1x32xf32>
      %209 = arith.mulf %208, %208 : vector<1x32xf32>
      %210 = vector.shape_cast %209 : vector<1x32xf32> to vector<1x1x32xf32>
      %cst_94 = arith.constant dense<0.000000e+00> : vector<1xf32>
      %211 = vector.multi_reduction <add>, %210, %cst_94 [1, 2] : vector<1x1x32xf32> to vector<1xf32>
      %212 = vector.shape_cast %211 : vector<1xf32> to vector<1x1x1xf32>
      %213 = vector.extract %212[0, 0, 0] : f32 from vector<1x1x1xf32>
      %214 = vector.broadcast %213 : f32 to vector<1x1xf32>
      %215 = arith.subf %207, %214 : vector<1x1xf32>
      %216 = arith.addf %173, %215 : vector<1x1xf32>
      %217 = vector.broadcast %cst_47 : f32 to vector<1x1xf32>
      %218 = arith.mulf %216, %217 : vector<1x1xf32>
      %c0_95 = arith.constant 0 : index
      %c0_96 = arith.constant 0 : index
      %219 = vector.load %arg4[%c0_95, %c0_96] : memref<1x1xf32, #tpu.memory_space<vmem>>, vector<1x1xf32>
      tpu.vector_store %arg4[%c0_95, %c0_96], %218 {strides = array<i32>} : memref<1x1xf32, #tpu.memory_space<vmem>>, vector<1x1xf32>,
    } else {
    }
    return
  }
  func.func @transform_0(%arg0: i32) -> (i32, i32) {
    %c0_i32 = arith.constant 0 : i32
    %c0_i32_0 = arith.constant 0 : i32
    return %arg0, %c0_i32 : i32, i32
  }
  func.func @transform_1(%arg0: i32) -> (i32, i32) {
    %c0_i32 = arith.constant 0 : i32
    %c0_i32_0 = arith.constant 0 : i32
    return %arg0, %c0_i32 : i32, i32
  }
  func.func @transform_2(%arg0: i32) -> (i32, i32) {
    %c0_i32 = arith.constant 0 : i32
    %c0_i32_0 = arith.constant 0 : i32
    %c0_i32_1 = arith.constant 0 : i32
    return %c0_i32, %c0_i32_0 : i32, i32
  }
  func.func @transform_3(%arg0: i32) -> (i32, i32) {
    %c0_i32 = arith.constant 0 : i32
    %c0_i32_0 = arith.constant 0 : i32
    %c0_i32_1 = arith.constant 0 : i32
    return %c0_i32, %c0_i32_0 : i32, i32
  }
  func.func @transform_4(%arg0: i32) -> (i32, i32) {
    %c0_i32 = arith.constant 0 : i32
    %c0_i32_0 = arith.constant 0 : i32
    %c0_i32_1 = arith.constant 0 : i32
    return %c0_i32, %c0_i32_0 : i32, i32
  }
}

</mosaic_0001>

<llo_original>
// kernel: vicreg_loss.1
$region0: #{vicreg_loss.1}
  #allocation0 [shape = 'u32[]', space=smem, size = 0x4, offset = 0x4, fixed_abs, tag = 'smem constant byte address 0x4 - core index']
  #allocation1 [shape = 'u32[144,128]{1,0:T(1,128)}', space=vmem, size = 0x12000, scoped, tag = 'internal scratch']
  #allocation2 [shape = 'f32[32,32]{1,0:T(8,128)}', space=vmem, size = 0x4000, scoped, tag = 'scratch operand']
  #allocation3 [shape = 'f32[32,32]{1,0:T(8,128)}', space=vmem, size = 0x4000, scoped, tag = 'scratch operand']
  #allocation4 [shape = 'f32[1,32]{1,0:T(1,128)}', space=vmem, size = 0x200, scoped, tag = 'scratch operand']
  #allocation5 [shape = 'f32[1,32]{1,0:T(1,128)}', space=vmem, size = 0x200, scoped, tag = 'scratch operand']
  #allocation6 [shape = 'f32[1,32]{1,0:T(1,128)}', space=vmem, size = 0x200, scoped, tag = 'scratch operand']
  #allocation7 [shape = 'f32[1,32]{1,0:T(1,128)}', space=vmem, size = 0x200, scoped, tag = 'scratch operand']
  #allocation8 [shape = 'f32[1,32]{1,0:T(1,128)}', space=vmem, size = 0x200, scoped, tag = 'scratch operand']
  %s0 = inlined_call_operand.hbm [shape: f32[8,32], index: 0, kind: input, shape index: {}]
  %s1 = inlined_call_operand.hbm [shape: f32[8,32], index: 1, kind: input, shape index: {}]
  %s2 = inlined_call_operand.hbm [shape: f32[1,1], index: 2, kind: output, shape index: {0}]
  %s3 = inlined_call_operand.hbm [shape: f32[1,1], index: 3, kind: output, shape index: {1}]
  %s4 = inlined_call_operand.hbm [shape: f32[1,1], index: 4, kind: output, shape index: {2}]
  %5 = xla_tuple %s2, %s3, %s4
  %s6 = sld [smem:[#allocation0]]
  $region50: #{vicreg_loss.1} parent=0
    _
  %s8 = ssub.s32 1, %s6
  %s9 = scalar_select 0, %s8, %s6
  $region1: #{vicreg_loss.1} parent=0
    #allocation9 [shape = 'u8[4096]{0}', space=vmem, size = 0x1000, scoped, tag = 'input window, operand 0, single buffered']
    #allocation10 [shape = 's32[1]{0}', space=sflag, size = 0x4, scoped, tag = 'scoped memory for vicreg_loss.1']
    #allocation11 [shape = 's32[1]{0}', space=sflag, size = 0x4, scoped, tag = 'scoped memory for vicreg_loss.1']
    #allocation12 [shape = 'u8[4096]{0}', space=vmem, size = 0x1000, scoped, tag = 'input window, operand 1, single buffered']
    #allocation13 [shape = 's32[1]{0}', space=sflag, size = 0x4, scoped, tag = 'scoped memory for vicreg_loss.1']
    #allocation14 [shape = 'u8[512]{0}', space=vmem, size = 0x400, scoped, tag = 'output window, operand 0, single buffered']
    #allocation15 [shape = 'u8[512]{0}', space=vmem, size = 0x400, scoped, tag = 'output window, operand 1, single buffered']
    #allocation16 [shape = 's32[1]{0}', space=sflag, size = 0x4, scoped, tag = 'scoped memory for vicreg_loss.1']
    #allocation17 [shape = 'u8[512]{0}', space=vmem, size = 0x400, scoped, tag = 'output window, operand 2, single buffered']
    %10 = vsyncpa [#allocation10], 0
    %11 = vsyncpa [#allocation13], 0
    %12 = vsyncpa [#allocation11], 0
    %13 = vsyncpa [#allocation16], 0
    // Predicated region
    $region2: #{vicreg_loss.1} parent=1 // pred_check
      _
    $region3: #{vicreg_loss.1} parent=1 // pred_check_branch
      %15 = sbr.rel (0) target = $region5
    $region4: #{vicreg_loss.1} parent=1 // pred_region
      %s17 = ssub.s32 128, 128
      %18 = vsyncadd [#allocation10], %s17
      %s20 = sshll.u32 [#allocation9], 4
      %s21 = int_to_ptr.vmem [resolvable:$true] %s20
      %23 = dma.hbm_to_vmem [thread:$0]  %s0, 128, %s21, [#allocation10]
    $region5: #{vicreg_loss.1} parent=1 // pred_fallthru
      _
    // Predicated region
    $region6: #{vicreg_loss.1} parent=1 // pred_check
      _
    $region7: #{vicreg_loss.1} parent=1 // pred_check_branch
      %25 = sbr.rel (0) target = $region9
    $region8: #{vicreg_loss.1} parent=1 // pred_region
      %s27 = ssub.s32 128, 128
      %28 = vsyncadd [#allocation13], %s27
      %s30 = sshll.u32 [#allocation12], 4
      %s31 = int_to_ptr.vmem [resolvable:$true] %s30
      %33 = dma.hbm_to_vmem [thread:$0]  %s1, 128, %s31, [#allocation13]
    $region9: #{vicreg_loss.1} parent=1 // pred_fallthru
      _
    // Predicated region
    $region10: #{vicreg_loss.1} parent=1 // pred_check
      _
    $region11: #{vicreg_loss.1} parent=1 // pred_check_branch
      %35 = sbr.rel (0) target = $region13
    $region12: #{vicreg_loss.1} parent=1 // pred_region
      %36 = dma.done [#allocation10], 128
    $region13: #{vicreg_loss.1} parent=1 // pred_fallthru
      _
    // Predicated region
    $region14: #{vicreg_loss.1} parent=1 // pred_check
      _
    $region15: #{vicreg_loss.1} parent=1 // pred_check_branch
      %38 = sbr.rel (0) target = $region17
    $region16: #{vicreg_loss.1} parent=1 // pred_region
      %39 = dma.done [#allocation13], 128
    $region17: #{vicreg_loss.1} parent=1 // pred_fallthru
      _
    %p41 = scmp.eq.s32.totalorder 0, 0
    // Predicated region
    $region18: #{vicreg_loss.1} parent=1 // pred_check
      %p42 = pneg %p41
    $region19: #{vicreg_loss.1} parent=1 // pred_check_branch
      %44 = sbr.rel (%p42) target = $region21
    $region20: #{vicreg_loss.1} parent=1 // pred_region
      %vm45 = vcmask 261120
      %46 = vst.msk [vmem:[#allocation2] sm:$0xff] %vm45, 0.0
      %47 = vst.msk [vmem:[#allocation2 + $0x8] sm:$0xff] %vm45, 0.0
      %48 = vst.msk [vmem:[#allocation2 + $0x10] sm:$0xff] %vm45, 0.0
      %49 = vst.msk [vmem:[#allocation2 + $0x18] sm:$0xff] %vm45, 0.0
      %50 = vst.msk [vmem:[#allocation3] sm:$0xff] %vm45, 0.0
      %51 = vst.msk [vmem:[#allocation3 + $0x8] sm:$0xff] %vm45, 0.0
      %52 = vst.msk [vmem:[#allocation3 + $0x10] sm:$0xff] %vm45, 0.0
      %53 = vst.msk [vmem:[#allocation3 + $0x18] sm:$0xff] %vm45, 0.0
      %vm54 = vcmask 253952
      %55 = vst.msk [vmem:[#allocation4] sm:$0x1] %vm54, 0.0
      %56 = vst.msk [vmem:[#allocation5] sm:$0x1] %vm54, 0.0
      %57 = vst.msk [vmem:[#allocation6] sm:$0x1] %vm54, 0.0
      %58 = vst.msk [vmem:[#allocation7] sm:$0x1] %vm54, 0.0
      %59 = vst.msk [vmem:[#allocation8] sm:$0x1] %vm54, 0.0
    $region21: #{vicreg_loss.1} parent=1 // pred_fallthru
      _
    %v60 = vld [vmem:[#allocation9] sm:$0xff]
    %v61 = vld [vmem:[#allocation12] sm:$0xff]
    %v62 = vmul.f32 %v60, %v60
    %vm63 = vcmask 261120
    %v64 = vsel %vm63, %v62, 0.0
    %65 = vadd.xlane.f32.xlu0 %v64
    %v66 = vpop.xlane.xlu0 %65
    %v67 = vmax.f32 %v66, 1e-24
    %v68 = vrsqrt.pop %v67
    %v69 = vmul.f32 %v60, %v68
    %v70 = vmul.f32 %v61, %v61
    %v71 = vsel %vm63, %v70, 0.0
    %72 = vadd.xlane.f32.xlu0 %v71
    %v73 = vpop.xlane.xlu0 %72
    %v74 = vmax.f32 %v73, 1e-24
    %v75 = vrsqrt.pop %v74
    %v76 = vmul.f32 %v61, %v75
    %v77 = vld [vmem:[#allocation4] sm:$0x1]
    %v78 = vsel %vm63, %v69, 0.0
    %v79 = vrot.slane %v78, 4
    %v80 = vadd.f32 %v78, %v79
    %v81 = vrot.slane %v80, 2
    %v82 = vadd.f32 %v80, %v81
    %v83 = vrot.slane %v82, 1
    %v84 = vadd.f32 %v82, %v83
    %v85 = vadd.f32 %v77, %v84
    %vm86 = vcmask 253952
    %87 = vst.msk [vmem:[#allocation4] sm:$0x1] %vm86, %v85
    %v88 = vld [vmem:[#allocation5] sm:$0x1]
    %v89 = vsel %vm63, %v76, 0.0
    %v90 = vrot.slane %v89, 4
    %v91 = vadd.f32 %v89, %v90
    %v92 = vrot.slane %v91, 2
    %v93 = vadd.f32 %v91, %v92
    %v94 = vrot.slane %v93, 1
    %v95 = vadd.f32 %v93, %v94
    %v96 = vadd.f32 %v88, %v95
    %97 = vst.msk [vmem:[#allocation5] sm:$0x1] %vm86, %v96
    %v98 = vld [vmem:[#allocation6] sm:$0x1]
    %v99 = vmul.f32 %v69, %v69
    %v100 = vsel %vm63, %v99, 0.0
    %v101 = vrot.slane %v100, 4
    %v102 = vadd.f32 %v100, %v101
    %v103 = vrot.slane %v102, 2
    %v104 = vadd.f32 %v102, %v103
    %v105 = vrot.slane %v104, 1
    %v106 = vadd.f32 %v104, %v105
    %v107 = vadd.f32 %v98, %v106
    %108 = vst.msk [vmem:[#allocation6] sm:$0x1] %vm86, %v107
    %v109 = vld [vmem:[#allocation7] sm:$0x1]
    %v110 = vmul.f32 %v76, %v76
    %v111 = vsel %vm63, %v110, 0.0
    %v112 = vrot.slane %v111, 4
    %v113 = vadd.f32 %v111, %v112
    %v114 = vrot.slane %v113, 2
    %v115 = vadd.f32 %v113, %v114
    %v116 = vrot.slane %v115, 1
    %v117 = vadd.f32 %v115, %v116
    %v118 = vadd.f32 %v109, %v117
    %119 = vst.msk [vmem:[#allocation7] sm:$0x1] %vm86, %v118
    %v120 = vld [vmem:[#allocation8] sm:$0x1]
    %v121 = vmul.f32 %v69, %v76
    %v122 = vsel %vm63, %v121, 0.0
    %v123 = vrot.slane %v122, 4
    %v124 = vadd.f32 %v122, %v123
    %v125 = vrot.slane %v124, 2
    %v126 = vadd.f32 %v124, %v125
    %v127 = vrot.slane %v126, 1
    %v128 = vadd.f32 %v126, %v127
    %v129 = vadd.f32 %v120, %v128
    %130 = vst.msk [vmem:[#allocation8] sm:$0x1] %vm86, %v129
    %v131 = vpack.c.bf16 %v69, %v69
    %v132 = vpack.c.bf16 %v76, %v76
    %v133 = vld [vmem:[#allocation2] sm:$0xff]
    %v134 = vld [vmem:[#allocation2 + $0x8] sm:$0xff]
    %v135 = vld [vmem:[#allocation2 + $0x10] sm:$0xff]
    %v136 = vld [vmem:[#allocation2 + $0x18] sm:$0xff]
    %137 = vxpose.xlu0.c.b16.start [1/8] %v131, 128
    %138 = vxpose.xlu0.c.b16.cont [2/8] 0, 128
    %139 = vxpose.xlu0.c.b16.cont [3/8] 0, 128
    %140 = vxpose.xlu0.c.b16.cont [4/8] 0, 128
    %141 = vxpose.xlu0.c.b16.cont [5/8] 0, 128
    %142 = vxpose.xlu0.c.b16.cont [6/8] 0, 128
    %143 = vxpose.xlu0.c.b16.cont [7/8] 0, 128
    %144 = vxpose.xlu0.c.b16.end [8/8] 0, 128
    %v145 = vpop.trf.xlu0
    %v146 = vpop.trf.xlu0
    %v147 = vpop.trf.xlu0
    %v148 = vpop.trf.xlu0
    %v149 = vpop.trf.xlu0
    %v150 = vpop.trf.xlu0
    %v151 = vpop.trf.xlu0
    %v152 = vpop.trf.xlu0
    %vm153 = vcmask 64512
    %v155 = vsel %vm153, %v145, 0
    %v158 = vsel %vm153, %v146, 0
    %vm160 = vcmask 1043456
    %v162 = vsel %vm160, %v131, 0
    %164 = vmatprep.subr.bf16.mxu0 0
    %165 = vmatpush1.bf16.msra.mxu0 0
    %166 = vmatprep.subr.bf16.mxu0 0
    %167 = vmatpush1.bf16.msra.mxu0 0
    %168 = vmatprep.subr.bf16.mxu0 0
    %169 = vmatpush1.bf16.msra.mxu0 0
    %170 = vmatprep.subr.bf16.mxu0 0
    %171 = vmatpush1.bf16.msra.mxu0 0
    %172 = vmatprep.subr.bf16.mxu0 0
    %173 = vmatpush1.bf16.msra.mxu0 0
    %174 = vmatprep.subr.bf16.mxu0 0
    %175 = vmatpush1.bf16.msra.mxu0 0
    %176 = vmatprep.subr.bf16.mxu0 0
    %177 = vmatpush1.bf16.msra.mxu0 0
    %178 = vmatprep.subr.bf16.mxu0 0
    %179 = vmatpush1.bf16.msra.mxu0 %v162
    %180 = vmatprep.subr.bf16.mxu0 0
    %181 = vmatpush2.bf16.msra.mxu0 0
    %182 = vmatprep.subr.bf16.mxu0 0
    %183 = vmatpush2.bf16.msra.mxu0 0
    %184 = vmatprep.subr.bf16.mxu0 0
    %185 = vmatpush2.bf16.msra.mxu0 0
    %186 = vmatprep.subr.bf16.mxu0 0
    %187 = vmatpush2.bf16.msra.mxu0 0
    %188 = vmatprep.subr.bf16.mxu0 0
    %189 = vmatpush2.bf16.msra.mxu0 0
    %190 = vmatprep.subr.bf16.mxu0 0
    %191 = vmatpush2.bf16.msra.mxu0 0
    %192 = vmatprep.subr.bf16.mxu0 0
    %193 = vmatpush2.bf16.msra.mxu0 0
    %194 = vmatprep.subr.bf16.mxu0 0
    %195 = vmatpush2.bf16.msra.mxu0 0
    %196 = vmatprep.mubr.bf16.mxu0 0
    %197 = vmatmul.mubr.bf16.gmra.mxu0 %v155
    %v198 = vpop.f32.mrf.mxu0
    %v199 = vadd.f32 0.0, %v198
    %v200 = vpop.f32.mrf.mxu0
    %v201 = vpop.f32.mrf.mxu0
    %v202 = vadd.f32 0.0, %v201
    %v203 = vpop.f32.mrf.mxu0
    %204 = vmatprep.mubr.bf16.mxu0 0
    %205 = vmatmul.mubr.bf16.gmra.mxu0 %v158
    %v206 = vpop.f32.mrf.mxu0
    %v207 = vadd.f32 0.0, %v206
    %v208 = vpop.f32.mrf.mxu0
    %v209 = vpop.f32.mrf.mxu0
    %v210 = vadd.f32 0.0, %v209
    %v211 = vpop.f32.mrf.mxu0
    %212 = vdwg.mxu0
    %v213 = vadd.f32 %v133, %v199
    %v214 = vadd.f32 %v134, %v202
    %v215 = vadd.f32 %v135, %v207
    %v216 = vadd.f32 %v136, %v210
    %217 = vst.msk [vmem:[#allocation2] sm:$0xff] %vm63, %v213
    %218 = vst.msk [vmem:[#allocation2 + $0x8] sm:$0xff] %vm63, %v214
    %219 = vst.msk [vmem:[#allocation2 + $0x10] sm:$0xff] %vm63, %v215
    %220 = vst.msk [vmem:[#allocation2 + $0x18] sm:$0xff] %vm63, %v216
    %v221 = vld [vmem:[#allocation3] sm:$0xff]
    %v222 = vld [vmem:[#allocation3 + $0x8] sm:$0xff]
    %v223 = vld [vmem:[#allocation3 + $0x10] sm:$0xff]
    %v224 = vld [vmem:[#allocation3 + $0x18] sm:$0xff]
    %225 = vxpose.xlu0.c.b16.start [1/8] %v132, 128
    %226 = vxpose.xlu0.c.b16.cont [2/8] 0, 128
    %227 = vxpose.xlu0.c.b16.cont [3/8] 0, 128
    %228 = vxpose.xlu0.c.b16.cont [4/8] 0, 128
    %229 = vxpose.xlu0.c.b16.cont [5/8] 0, 128
    %230 = vxpose.xlu0.c.b16.cont [6/8] 0, 128
    %231 = vxpose.xlu0.c.b16.cont [7/8] 0, 128
    %232 = vxpose.xlu0.c.b16.end [8/8] 0, 128
    %v233 = vpop.trf.xlu0
    %v234 = vpop.trf.xlu0
    %v235 = vpop.trf.xlu0
    %v236 = vpop.trf.xlu0
    %v237 = vpop.trf.xlu0
    %v238 = vpop.trf.xlu0
    %v239 = vpop.trf.xlu0
    %v240 = vpop.trf.xlu0
    %v242 = vsel %vm153, %v233, 0
    %v245 = vsel %vm153, %v234, 0
    %v248 = vsel %vm160, %v132, 0
    %250 = vmatprep.subr.bf16.mxu0 0
    %251 = vmatpush1.bf16.msra.mxu0 0
    %252 = vmatprep.subr.bf16.mxu0 0
    %253 = vmatpush1.bf16.msra.mxu0 0
    %254 = vmatprep.subr.bf16.mxu0 0
    %255 = vmatpush1.bf16.msra.mxu0 0
    %256 = vmatprep.subr.bf16.mxu0 0
    %257 = vmatpush1.bf16.msra.mxu0 0
    %258 = vmatprep.subr.bf16.mxu0 0
    %259 = vmatpush1.bf16.msra.mxu0 0
    %260 = vmatprep.subr.bf16.mxu0 0
    %261 = vmatpush1.bf16.msra.mxu0 0
    %262 = vmatprep.subr.bf16.mxu0 0
    %263 = vmatpush1.bf16.msra.mxu0 0
    %264 = vmatprep.subr.bf16.mxu0 0
    %265 = vmatpush1.bf16.msra.mxu0 %v248
    %266 = vmatprep.subr.bf16.mxu0 0
    %267 = vmatpush2.bf16.msra.mxu0 0
    %268 = vmatprep.subr.bf16.mxu0 0
    %269 = vmatpush2.bf16.msra.mxu0 0
    %270 = vmatprep.subr.bf16.mxu0 0
    %271 = vmatpush2.bf16.msra.mxu0 0
    %272 = vmatprep.subr.bf16.mxu0 0
    %273 = vmatpush2.bf16.msra.mxu0 0
    %274 = vmatprep.subr.bf16.mxu0 0
    %275 = vmatpush2.bf16.msra.mxu0 0
    %276 = vmatprep.subr.bf16.mxu0 0
    %277 = vmatpush2.bf16.msra.mxu0 0
    %278 = vmatprep.subr.bf16.mxu0 0
    %279 = vmatpush2.bf16.msra.mxu0 0
    %280 = vmatprep.subr.bf16.mxu0 0
    %281 = vmatpush2.bf16.msra.mxu0 0
    %282 = vmatprep.mubr.bf16.mxu0 0
    %283 = vmatmul.mubr.bf16.gmra.mxu0 %v242
    %v284 = vpop.f32.mrf.mxu0
    %v285 = vadd.f32 0.0, %v284
    %v286 = vpop.f32.mrf.mxu0
    %v287 = vpop.f32.mrf.mxu0
    %v288 = vadd.f32 0.0, %v287
    %v289 = vpop.f32.mrf.mxu0
    %290 = vmatprep.mubr.bf16.mxu0 0
    %291 = vmatmul.mubr.bf16.gmra.mxu0 %v245
    %v292 = vpop.f32.mrf.mxu0
    %v293 = vadd.f32 0.0, %v292
    %v294 = vpop.f32.mrf.mxu0
    %v295 = vpop.f32.mrf.mxu0
    %v296 = vadd.f32 0.0, %v295
    %v297 = vpop.f32.mrf.mxu0
    %298 = vdwg.mxu0
    %v299 = vadd.f32 %v221, %v285
    %v300 = vadd.f32 %v222, %v288
    %v301 = vadd.f32 %v223, %v293
    %v302 = vadd.f32 %v224, %v296
    %303 = vst.msk [vmem:[#allocation3] sm:$0xff] %vm63, %v299
    %304 = vst.msk [vmem:[#allocation3 + $0x8] sm:$0xff] %vm63, %v300
    %305 = vst.msk [vmem:[#allocation3 + $0x10] sm:$0xff] %vm63, %v301
    %306 = vst.msk [vmem:[#allocation3 + $0x18] sm:$0xff] %vm63, %v302
    // Predicated region
    $region22: #{vicreg_loss.1} parent=1 // pred_check
      %p307 = pneg %p41
    $region23: #{vicreg_loss.1} parent=1 // pred_check_branch
      %309 = sbr.rel (%p307) target = $region25
    $region24: #{vicreg_loss.1} parent=1 // pred_region
      %v310 = vld [vmem:[#allocation6] sm:$0x1]
      %v311 = vld [vmem:[#allocation7] sm:$0x1]
      %v312 = vld [vmem:[#allocation4] sm:$0x1]
      %v313 = vmul.f32 %v312, 0.125
      %v314 = vld [vmem:[#allocation5] sm:$0x1]
      %v315 = vmul.f32 %v314, 0.125
      %v316 = vmul.f32 %v313, 8.0
      %v317 = vmul.f32 %v316, %v313
      %v318 = vsub.f32 %v310, %v317
      %v319 = vmul.f32 %v318, 0.14285715
      %v320 = vmax.f32 %v319, 0.0
      %v321 = vmul.f32 %v315, 8.0
      %v322 = vmul.f32 %v321, %v315
      %v323 = vsub.f32 %v311, %v322
      %v324 = vmul.f32 %v323, 0.14285715
      %v325 = vmax.f32 %v324, 0.0
      %v326 = vadd.f32 %v310, %v311
      %v327 = vld [vmem:[#allocation8] sm:$0x1]
      %v328 = vmul.f32 %v327, 2.0
      %v329 = vsub.f32 %v326, %v328
      %v330 = vsel %vm86, %v329, 0.0
      %331 = vadd.xlane.f32.xlu0 %v330
      %v332 = vpop.xlane.xlu0 %331
      %v333 = vrot.slane %v332, 4
      %v334 = vadd.f32 %v332, %v333
      %v335 = vrot.slane %v334, 2
      %v336 = vadd.f32 %v334, %v335
      %v337 = vrot.slane %v336, 1
      %v338 = vadd.f32 %v336, %v337
      %s339 = vtos %v338
      %v340 = vstv %s339
      %v341 = vmul.f32 %v340, 0.00390625
      %vm342 = vcmask 0
      %343 = vst.msk [vmem:[#allocation14] sm:$0x1] %vm342, %v341
      %v344 = vadd.f32 %v320, 0.0001
      %v345 = vrsqrt.pop %v344
      %v346 = vmul.f32 %v344, %v345
      %vm347 = vcmp.eq.f32.partialorder %v344, inf
      %v348 = vsel %vm347, %v344, %v346
      %vm349 = vcmp.eq.f32.partialorder %v344, 0.0
      %v350 = vand.u32 %v344, 2147483648
      %v351 = vsel %vm349, %v350, %v348
      %v352 = vadd.f32 %v325, 0.0001
      %v353 = vrsqrt.pop %v352
      %v354 = vmul.f32 %v352, %v353
      %vm355 = vcmp.eq.f32.partialorder %v352, inf
      %v356 = vsel %vm355, %v352, %v354
      %vm357 = vcmp.eq.f32.partialorder %v352, 0.0
      %v358 = vand.u32 %v352, 2147483648
      %v359 = vsel %vm357, %v358, %v356
      %v360 = vsub.f32 1.0, %v351
      %v361 = vmax.f32 %v360, 0.0
      %v362 = vsel %vm86, %v361, 0.0
      %363 = vadd.xlane.f32.xlu0 %v362
      %v364 = vpop.xlane.xlu0 %363
      %v365 = vrot.slane %v364, 4
      %v366 = vadd.f32 %v364, %v365
      %v367 = vrot.slane %v366, 2
      %v368 = vadd.f32 %v366, %v367
      %v369 = vrot.slane %v368, 1
      %v370 = vadd.f32 %v368, %v369
      %s371 = vtos %v370
      %v372 = vstv %s371
      %v373 = vsub.f32 1.0, %v359
      %v374 = vmax.f32 %v373, 0.0
      %v375 = vsel %vm86, %v374, 0.0
      %376 = vadd.xlane.f32.xlu0 %v375
      %v377 = vpop.xlane.xlu0 %376
      %v378 = vrot.slane %v377, 4
      %v379 = vadd.f32 %v377, %v378
      %v380 = vrot.slane %v379, 2
      %v381 = vadd.f32 %v379, %v380
      %v382 = vrot.slane %v381, 1
      %v383 = vadd.f32 %v381, %v382
      %s384 = vtos %v383
      %v385 = vstv %s384
      %v386 = vadd.f32 %v372, %v385
      %v387 = vmul.f32 %v386, 0.015625
      %388 = vst.msk [vmem:[#allocation17] sm:$0x1] %vm342, %v387
      %v389 = vrsqrt.pop %v320
      %v390 = vrsqrt.pop %v325
      %v391 = vmul.f32 %v389, %v389
      %v392 = vmul.f32 %v390, %v390
      %v393 = vld [vmem:[#allocation2] sm:$0xff]
      %v394 = vld [vmem:[#allocation2 + $0x8] sm:$0xff]
      %v395 = vld [vmem:[#allocation2 + $0x10] sm:$0xff]
      %v396 = vld [vmem:[#allocation2 + $0x18] sm:$0xff]
      %v397 = vmul.f32 %v313, %v391
      %v398 = vmul.f32 %v393, %v393
      %v399 = vmul.f32 %v394, %v394
      %v400 = vmul.f32 %v395, %v395
      %v401 = vmul.f32 %v396, %v396
      %v403 = vsel %vm63, %v391, 0
      %405 = vmatprep.subr.mxu0 0.0
      %406 = vmatpush1.msra.mxu0 0.0
      %407 = vmatprep.subr.mxu0 0.0
      %408 = vmatpush1.msra.mxu0 0.0
      %409 = vmatprep.subr.mxu0 0.0
      %410 = vmatpush1.msra.mxu0 0.0
      %411 = vmatprep.subr.mxu0 0.0
      %412 = vmatpush1.msra.mxu0 0.0
      %413 = vmatprep.subr.mxu0 0.0
      %414 = vmatpush1.msra.mxu0 0.0
      %415 = vmatprep.subr.mxu0 0.0
      %416 = vmatpush1.msra.mxu0 0.0
      %417 = vmatprep.subr.mxu0 0.0
      %418 = vmatpush1.msra.mxu0 0.0
      %419 = vmatprep.subr.mxu0 0.0
      %420 = vmatpush1.msra.mxu0 0.0
      %421 = vmatprep.subr.mxu0 0.0
      %422 = vmatpush1.msra.mxu0 0.0
      %423 = vmatprep.subr.mxu0 0.0
      %424 = vmatpush1.msra.mxu0 0.0
      %425 = vmatprep.subr.mxu0 0.0
      %426 = vmatpush1.msra.mxu0 0.0
      %427 = vmatprep.subr.mxu0 0.0
      %428 = vmatpush1.msra.mxu0 0.0
      %429 = vmatprep.subr.mxu0 0.0
      %430 = vmatpush1.msra.mxu0 %v401
      %431 = vmatprep.subr.mxu0 0.0
      %432 = vmatpush1.msra.mxu0 %v400
      %433 = vmatprep.subr.mxu0 0.0
      %434 = vmatpush1.msra.mxu0 %v399
      %435 = vmatprep.subr.mxu0 0.0
      %436 = vmatpush1.msra.mxu0 %v398
      %437 = vmatprep.subr.mxu0 0.0
      %438 = vmatpush2.msra.mxu0 0.0
      %439 = vmatprep.subr.mxu0 0.0
      %440 = vmatpush2.msra.mxu0 0.0
      %441 = vmatprep.subr.mxu0 0.0
      %442 = vmatpush2.msra.mxu0 0.0
      %443 = vmatprep.subr.mxu0 0.0
      %444 = vmatpush2.msra.mxu0 0.0
      %445 = vmatprep.subr.mxu0 0.0
      %446 = vmatpush2.msra.mxu0 0.0
      %447 = vmatprep.subr.mxu0 0.0
      %448 = vmatpush2.msra.mxu0 0.0
      %449 = vmatprep.subr.mxu0 0.0
      %450 = vmatpush2.msra.mxu0 0.0
      %451 = vmatprep.subr.mxu0 0.0
      %452 = vmatpush2.msra.mxu0 0.0
      %453 = vmatprep.subr.mxu0 0.0
      %454 = vmatpush2.msra.mxu0 0.0
      %455 = vmatprep.subr.mxu0 0.0
      %456 = vmatpush2.msra.mxu0 0.0
      %457 = vmatprep.subr.mxu0 0.0
      %458 = vmatpush2.msra.mxu0 0.0
      %459 = vmatprep.subr.mxu0 0.0
      %460 = vmatpush2.msra.mxu0 0.0
      %461 = vmatprep.subr.mxu0 0.0
      %462 = vmatpush2.msra.mxu0 0.0
      %463 = vmatprep.subr.mxu0 0.0
      %464 = vmatpush2.msra.mxu0 0.0
      %465 = vmatprep.subr.mxu0 0.0
      %466 = vmatpush2.msra.mxu0 0.0
      %467 = vmatprep.subr.mxu0 0.0
      %468 = vmatpush2.msra.mxu0 0.0
      %469 = vmatprep.mubr.f32.mxu0 0.0
      %470 = vmatmul.mubr.f32.gmra.mxu0 %v403
      %v471 = vpop.f32.mrf.mxu0
      %v472 = vadd.f32 0.0, %v471
      %v473 = vpop.f32.mrf.mxu0
      %474 = vdwg.mxu0
      %v475 = vmul.f32 %v472, %v391
      %v476 = vsel %vm86, %v475, 0.0
      %477 = vadd.xlane.f32.xlu0 %v476
      %v478 = vpop.xlane.xlu0 %477
      %v479 = vrot.slane %v478, 4
      %v480 = vadd.f32 %v478, %v479
      %v481 = vrot.slane %v480, 2
      %v482 = vadd.f32 %v480, %v481
      %v483 = vrot.slane %v482, 1
      %v484 = vadd.f32 %v482, %v483
      %s485 = vtos %v484
      %v486 = vstv %s485
      %v488 = vsel %vm63, %v397, 0
      %490 = vmatprep.subr.mxu0 0.0
      %491 = vmatpush1.msra.mxu0 0.0
      %492 = vmatprep.subr.mxu0 0.0
      %493 = vmatpush1.msra.mxu0 0.0
      %494 = vmatprep.subr.mxu0 0.0
      %495 = vmatpush1.msra.mxu0 0.0
      %496 = vmatprep.subr.mxu0 0.0
      %497 = vmatpush1.msra.mxu0 0.0
      %498 = vmatprep.subr.mxu0 0.0
      %499 = vmatpush1.msra.mxu0 0.0
      %500 = vmatprep.subr.mxu0 0.0
      %501 = vmatpush1.msra.mxu0 0.0
      %502 = vmatprep.subr.mxu0 0.0
      %503 = vmatpush1.msra.mxu0 0.0
      %504 = vmatprep.subr.mxu0 0.0
      %505 = vmatpush1.msra.mxu0 0.0
      %506 = vmatprep.subr.mxu0 0.0
      %507 = vmatpush1.msra.mxu0 0.0
      %508 = vmatprep.subr.mxu0 0.0
      %509 = vmatpush1.msra.mxu0 0.0
      %510 = vmatprep.subr.mxu0 0.0
      %511 = vmatpush1.msra.mxu0 0.0
      %512 = vmatprep.subr.mxu0 0.0
      %513 = vmatpush1.msra.mxu0 0.0
      %514 = vmatprep.subr.mxu0 0.0
      %515 = vmatpush1.msra.mxu0 %v396
      %516 = vmatprep.subr.mxu0 0.0
      %517 = vmatpush1.msra.mxu0 %v395
      %518 = vmatprep.subr.mxu0 0.0
      %519 = vmatpush1.msra.mxu0 %v394
      %520 = vmatprep.subr.mxu0 0.0
      %521 = vmatpush1.msra.mxu0 %v393
      %522 = vmatprep.subr.mxu0 0.0
      %523 = vmatpush2.msra.mxu0 0.0
      %524 = vmatprep.subr.mxu0 0.0
      %525 = vmatpush2.msra.mxu0 0.0
      %526 = vmatprep.subr.mxu0 0.0
      %527 = vmatpush2.msra.mxu0 0.0
      %528 = vmatprep.subr.mxu0 0.0
      %529 = vmatpush2.msra.mxu0 0.0
      %530 = vmatprep.subr.mxu0 0.0
      %531 = vmatpush2.msra.mxu0 0.0
      %532 = vmatprep.subr.mxu0 0.0
      %533 = vmatpush2.msra.mxu0 0.0
      %534 = vmatprep.subr.mxu0 0.0
      %535 = vmatpush2.msra.mxu0 0.0
      %536 = vmatprep.subr.mxu0 0.0
      %537 = vmatpush2.msra.mxu0 0.0
      %538 = vmatprep.subr.mxu0 0.0
      %539 = vmatpush2.msra.mxu0 0.0
      %540 = vmatprep.subr.mxu0 0.0
      %541 = vmatpush2.msra.mxu0 0.0
      %542 = vmatprep.subr.mxu0 0.0
      %543 = vmatpush2.msra.mxu0 0.0
      %544 = vmatprep.subr.mxu0 0.0
      %545 = vmatpush2.msra.mxu0 0.0
      %546 = vmatprep.subr.mxu0 0.0
      %547 = vmatpush2.msra.mxu0 0.0
      %548 = vmatprep.subr.mxu0 0.0
      %549 = vmatpush2.msra.mxu0 0.0
      %550 = vmatprep.subr.mxu0 0.0
      %551 = vmatpush2.msra.mxu0 0.0
      %552 = vmatprep.subr.mxu0 0.0
      %553 = vmatpush2.msra.mxu0 0.0
      %554 = vmatprep.mubr.f32.mxu0 0.0
      %555 = vmatmul.mubr.f32.gmra.mxu0 %v488
      %v556 = vpop.f32.mrf.mxu0
      %v557 = vadd.f32 0.0, %v556
      %v558 = vpop.f32.mrf.mxu0
      %559 = vdwg.mxu0
      %v560 = vmul.f32 %v557, %v397
      %v561 = vsel %vm86, %v560, 0.0
      %562 = vadd.xlane.f32.xlu0 %v561
      %v563 = vpop.xlane.xlu0 %562
      %v564 = vrot.slane %v563, 4
      %v565 = vadd.f32 %v563, %v564
      %v566 = vrot.slane %v565, 2
      %v567 = vadd.f32 %v565, %v566
      %v568 = vrot.slane %v567, 1
      %v569 = vadd.f32 %v567, %v568
      %s570 = vtos %v569
      %v571 = vstv %s570
      %v572 = vmul.f32 %v313, %v397
      %v573 = vsel %vm86, %v572, 0.0
      %574 = vadd.xlane.f32.xlu0 %v573
      %v575 = vpop.xlane.xlu0 %574
      %v576 = vrot.slane %v575, 4
      %v577 = vadd.f32 %v575, %v576
      %v578 = vrot.slane %v577, 2
      %v579 = vadd.f32 %v577, %v578
      %v580 = vrot.slane %v579, 1
      %v581 = vadd.f32 %v579, %v580
      %s582 = vtos %v581
      %v583 = vstv %s582
      %v584 = vmul.f32 %v571, 16.0
      %v585 = vsub.f32 %v486, %v584
      %v586 = vmul.f32 %v583, 64.0
      %v587 = vmul.f32 %v586, %v583
      %v588 = vadd.f32 %v585, %v587
      %v589 = vmul.f32 %v588, 0.020408163
      %v590 = vmul.f32 %v320, %v391
      %v591 = vmul.f32 %v590, %v590
      %v592 = vsel %vm86, %v591, 0.0
      %593 = vadd.xlane.f32.xlu0 %v592
      %v594 = vpop.xlane.xlu0 %593
      %v595 = vrot.slane %v594, 4
      %v596 = vadd.f32 %v594, %v595
      %v597 = vrot.slane %v596, 2
      %v598 = vadd.f32 %v596, %v597
      %v599 = vrot.slane %v598, 1
      %v600 = vadd.f32 %v598, %v599
      %s601 = vtos %v600
      %v602 = vstv %s601
      %v603 = vsub.f32 %v589, %v602
      %v604 = vld [vmem:[#allocation3] sm:$0xff]
      %v605 = vld [vmem:[#allocation3 + $0x8] sm:$0xff]
      %v606 = vld [vmem:[#allocation3 + $0x10] sm:$0xff]
      %v607 = vld [vmem:[#allocation3 + $0x18] sm:$0xff]
      %v608 = vmul.f32 %v315, %v392
      %v609 = vmul.f32 %v604, %v604
      %v610 = vmul.f32 %v605, %v605
      %v611 = vmul.f32 %v606, %v606
      %v612 = vmul.f32 %v607, %v607
      %v614 = vsel %vm63, %v392, 0
      %616 = vmatprep.subr.mxu0 0.0
      %617 = vmatpush1.msra.mxu0 0.0
      %618 = vmatprep.subr.mxu0 0.0
      %619 = vmatpush1.msra.mxu0 0.0
      %620 = vmatprep.subr.mxu0 0.0
      %621 = vmatpush1.msra.mxu0 0.0
      %622 = vmatprep.subr.mxu0 0.0
      %623 = vmatpush1.msra.mxu0 0.0
      %624 = vmatprep.subr.mxu0 0.0
      %625 = vmatpush1.msra.mxu0 0.0
      %626 = vmatprep.subr.mxu0 0.0
      %627 = vmatpush1.msra.mxu0 0.0
      %628 = vmatprep.subr.mxu0 0.0
      %629 = vmatpush1.msra.mxu0 0.0
      %630 = vmatprep.subr.mxu0 0.0
      %631 = vmatpush1.msra.mxu0 0.0
      %632 = vmatprep.subr.mxu0 0.0
      %633 = vmatpush1.msra.mxu0 0.0
      %634 = vmatprep.subr.mxu0 0.0
      %635 = vmatpush1.msra.mxu0 0.0
      %636 = vmatprep.subr.mxu0 0.0
      %637 = vmatpush1.msra.mxu0 0.0
      %638 = vmatprep.subr.mxu0 0.0
      %639 = vmatpush1.msra.mxu0 0.0
      %640 = vmatprep.subr.mxu0 0.0
      %641 = vmatpush1.msra.mxu0 %v612
      %642 = vmatprep.subr.mxu0 0.0
      %643 = vmatpush1.msra.mxu0 %v611
      %644 = vmatprep.subr.mxu0 0.0
      %645 = vmatpush1.msra.mxu0 %v610
      %646 = vmatprep.subr.mxu0 0.0
      %647 = vmatpush1.msra.mxu0 %v609
      %648 = vmatprep.subr.mxu0 0.0
      %649 = vmatpush2.msra.mxu0 0.0
      %650 = vmatprep.subr.mxu0 0.0
      %651 = vmatpush2.msra.mxu0 0.0
      %652 = vmatprep.subr.mxu0 0.0
      %653 = vmatpush2.msra.mxu0 0.0
      %654 = vmatprep.subr.mxu0 0.0
      %655 = vmatpush2.msra.mxu0 0.0
      %656 = vmatprep.subr.mxu0 0.0
      %657 = vmatpush2.msra.mxu0 0.0
      %658 = vmatprep.subr.mxu0 0.0
      %659 = vmatpush2.msra.mxu0 0.0
      %660 = vmatprep.subr.mxu0 0.0
      %661 = vmatpush2.msra.mxu0 0.0
      %662 = vmatprep.subr.mxu0 0.0
      %663 = vmatpush2.msra.mxu0 0.0
      %664 = vmatprep.subr.mxu0 0.0
      %665 = vmatpush2.msra.mxu0 0.0
      %666 = vmatprep.subr.mxu0 0.0
      %667 = vmatpush2.msra.mxu0 0.0
      %668 = vmatprep.subr.mxu0 0.0
      %669 = vmatpush2.msra.mxu0 0.0
      %670 = vmatprep.subr.mxu0 0.0
      %671 = vmatpush2.msra.mxu0 0.0
      %672 = vmatprep.subr.mxu0 0.0
      %673 = vmatpush2.msra.mxu0 0.0
      %674 = vmatprep.subr.mxu0 0.0
      %675 = vmatpush2.msra.mxu0 0.0
      %676 = vmatprep.subr.mxu0 0.0
      %677 = vmatpush2.msra.mxu0 0.0
      %678 = vmatprep.subr.mxu0 0.0
      %679 = vmatpush2.msra.mxu0 0.0
      %680 = vmatprep.mubr.f32.mxu0 0.0
      %681 = vmatmul.mubr.f32.gmra.mxu0 %v614
      %v682 = vpop.f32.mrf.mxu0
      %v683 = vadd.f32 0.0, %v682
      %v684 = vpop.f32.mrf.mxu0
      %685 = vdwg.mxu0
      %v686 = vmul.f32 %v683, %v392
      %v687 = vsel %vm86, %v686, 0.0
      %688 = vadd.xlane.f32.xlu0 %v687
      %v689 = vpop.xlane.xlu0 %688
      %v690 = vrot.slane %v689, 4
      %v691 = vadd.f32 %v689, %v690
      %v692 = vrot.slane %v691, 2
      %v693 = vadd.f32 %v691, %v692
      %v694 = vrot.slane %v693, 1
      %v695 = vadd.f32 %v693, %v694
      %s696 = vtos %v695
      %v697 = vstv %s696
      %v699 = vsel %vm63, %v608, 0
      %701 = vmatprep.subr.mxu0 0.0
      %702 = vmatpush1.msra.mxu0 0.0
      %703 = vmatprep.subr.mxu0 0.0
      %704 = vmatpush1.msra.mxu0 0.0
      %705 = vmatprep.subr.mxu0 0.0
      %706 = vmatpush1.msra.mxu0 0.0
      %707 = vmatprep.subr.mxu0 0.0
      %708 = vmatpush1.msra.mxu0 0.0
      %709 = vmatprep.subr.mxu0 0.0
      %710 = vmatpush1.msra.mxu0 0.0
      %711 = vmatprep.subr.mxu0 0.0
      %712 = vmatpush1.msra.mxu0 0.0
      %713 = vmatprep.subr.mxu0 0.0
      %714 = vmatpush1.msra.mxu0 0.0
      %715 = vmatprep.subr.mxu0 0.0
      %716 = vmatpush1.msra.mxu0 0.0
      %717 = vmatprep.subr.mxu0 0.0
      %718 = vmatpush1.msra.mxu0 0.0
      %719 = vmatprep.subr.mxu0 0.0
      %720 = vmatpush1.msra.mxu0 0.0
      %721 = vmatprep.subr.mxu0 0.0
      %722 = vmatpush1.msra.mxu0 0.0
      %723 = vmatprep.subr.mxu0 0.0
      %724 = vmatpush1.msra.mxu0 0.0
      %725 = vmatprep.subr.mxu0 0.0
      %726 = vmatpush1.msra.mxu0 %v607
      %727 = vmatprep.subr.mxu0 0.0
      %728 = vmatpush1.msra.mxu0 %v606
      %729 = vmatprep.subr.mxu0 0.0
      %730 = vmatpush1.msra.mxu0 %v605
      %731 = vmatprep.subr.mxu0 0.0
      %732 = vmatpush1.msra.mxu0 %v604
      %733 = vmatprep.subr.mxu0 0.0
      %734 = vmatpush2.msra.mxu0 0.0
      %735 = vmatprep.subr.mxu0 0.0
      %736 = vmatpush2.msra.mxu0 0.0
      %737 = vmatprep.subr.mxu0 0.0
      %738 = vmatpush2.msra.mxu0 0.0
      %739 = vmatprep.subr.mxu0 0.0
      %740 = vmatpush2.msra.mxu0 0.0
      %741 = vmatprep.subr.mxu0 0.0
      %742 = vmatpush2.msra.mxu0 0.0
      %743 = vmatprep.subr.mxu0 0.0
      %744 = vmatpush2.msra.mxu0 0.0
      %745 = vmatprep.subr.mxu0 0.0
      %746 = vmatpush2.msra.mxu0 0.0
      %747 = vmatprep.subr.mxu0 0.0
      %748 = vmatpush2.msra.mxu0 0.0
      %749 = vmatprep.subr.mxu0 0.0
      %750 = vmatpush2.msra.mxu0 0.0
      %751 = vmatprep.subr.mxu0 0.0
      %752 = vmatpush2.msra.mxu0 0.0
      %753 = vmatprep.subr.mxu0 0.0
      %754 = vmatpush2.msra.mxu0 0.0
      %755 = vmatprep.subr.mxu0 0.0
      %756 = vmatpush2.msra.mxu0 0.0
      %757 = vmatprep.subr.mxu0 0.0
      %758 = vmatpush2.msra.mxu0 0.0
      %759 = vmatprep.subr.mxu0 0.0
      %760 = vmatpush2.msra.mxu0 0.0
      %761 = vmatprep.subr.mxu0 0.0
      %762 = vmatpush2.msra.mxu0 0.0
      %763 = vmatprep.subr.mxu0 0.0
      %764 = vmatpush2.msra.mxu0 0.0
      %765 = vmatprep.mubr.f32.mxu0 0.0
      %766 = vmatmul.mubr.f32.gmra.mxu0 %v699
      %v767 = vpop.f32.mrf.mxu0
      %v768 = vadd.f32 0.0, %v767
      %v769 = vpop.f32.mrf.mxu0
      %770 = vdwg.mxu0
      %v771 = vmul.f32 %v768, %v608
      %v772 = vsel %vm86, %v771, 0.0
      %773 = vadd.xlane.f32.xlu0 %v772
      %v774 = vpop.xlane.xlu0 %773
      %v775 = vrot.slane %v774, 4
      %v776 = vadd.f32 %v774, %v775
      %v777 = vrot.slane %v776, 2
      %v778 = vadd.f32 %v776, %v777
      %v779 = vrot.slane %v778, 1
      %v780 = vadd.f32 %v778, %v779
      %s781 = vtos %v780
      %v782 = vstv %s781
      %v783 = vmul.f32 %v315, %v608
      %v784 = vsel %vm86, %v783, 0.0
      %785 = vadd.xlane.f32.xlu0 %v784
      %v786 = vpop.xlane.xlu0 %785
      %v787 = vrot.slane %v786, 4
      %v788 = vadd.f32 %v786, %v787
      %v789 = vrot.slane %v788, 2
      %v790 = vadd.f32 %v788, %v789
      %v791 = vrot.slane %v790, 1
      %v792 = vadd.f32 %v790, %v791
      %s793 = vtos %v792
      %v794 = vstv %s793
      %v795 = vmul.f32 %v782, 16.0
      %v796 = vsub.f32 %v697, %v795
      %v797 = vmul.f32 %v794, 64.0
      %v798 = vmul.f32 %v797, %v794
      %v799 = vadd.f32 %v796, %v798
      %v800 = vmul.f32 %v799, 0.020408163
      %v801 = vmul.f32 %v325, %v392
      %v802 = vmul.f32 %v801, %v801
      %v803 = vsel %vm86, %v802, 0.0
      %804 = vadd.xlane.f32.xlu0 %v803
      %v805 = vpop.xlane.xlu0 %804
      %v806 = vrot.slane %v805, 4
      %v807 = vadd.f32 %v805, %v806
      %v808 = vrot.slane %v807, 2
      %v809 = vadd.f32 %v807, %v808
      %v810 = vrot.slane %v809, 1
      %v811 = vadd.f32 %v809, %v810
      %s812 = vtos %v811
      %v813 = vstv %s812
      %v814 = vsub.f32 %v800, %v813
      %v815 = vadd.f32 %v603, %v814
      %v816 = vmul.f32 %v815, 0.03125
      %817 = vst.msk [vmem:[#allocation15] sm:$0x1] %vm342, %v816
    $region25: #{vicreg_loss.1} parent=1 // pred_fallthru
      _
    // Predicated region
    $region26: #{vicreg_loss.1} parent=1 // pred_check
      _
    $region27: #{vicreg_loss.1} parent=1 // pred_check_branch
      %819 = sbr.rel (0) target = $region29
    $region28: #{vicreg_loss.1} parent=1 // pred_region
      %s821 = ssub.s32 16, 16
      %822 = vsyncadd [#allocation11], %s821
      %s824 = sshll.u32 [#allocation14], 4
      %s825 = int_to_ptr.vmem [resolvable:$true] %s824
      %827 = dma.vmem_to_hbm [thread:$0]  %s825, 16, %s2, [#allocation11]
    $region29: #{vicreg_loss.1} parent=1 // pred_fallthru
      _
    // Predicated region
    $region30: #{vicreg_loss.1} parent=1 // pred_check
      _
    $region31: #{vicreg_loss.1} parent=1 // pred_check_branch
      %829 = sbr.rel (0) target = $region33
    $region32: #{vicreg_loss.1} parent=1 // pred_region
      %s831 = ssub.s32 16, 16
      %832 = vsyncadd [#allocation16], %s831
      %s834 = sshll.u32 [#allocation15], 4
      %s835 = int_to_ptr.vmem [resolvable:$true] %s834
      %837 = dma.vmem_to_hbm [thread:$0]  %s835, 16, %s3, [#allocation16]
    $region33: #{vicreg_loss.1} parent=1 // pred_fallthru
      _
    // Predicated region
    $region34: #{vicreg_loss.1} parent=1 // pred_check
      _
    $region35: #{vicreg_loss.1} parent=1 // pred_check_branch
      %839 = sbr.rel (0) target = $region37
    $region36: #{vicreg_loss.1} parent=1 // pred_region
      %s841 = ssub.s32 16, 16
      %842 = vsyncadd [#allocation16], %s841
      %s844 = sshll.u32 [#allocation17], 4
      %s845 = int_to_ptr.vmem [resolvable:$true] %s844
      %847 = dma.vmem_to_hbm [thread:$0]  %s845, 16, %s4, [#allocation16]
    $region37: #{vicreg_loss.1} parent=1 // pred_fallthru
      _
    // Predicated region
    $region38: #{vicreg_loss.1} parent=1 // pred_check
      _
    $region39: #{vicreg_loss.1} parent=1 // pred_check_branch
      %849 = sbr.rel (0) target = $region41
    $region40: #{vicreg_loss.1} parent=1 // pred_region
      %850 = dma.done [#allocation11], 16
    $region41: #{vicreg_loss.1} parent=1 // pred_fallthru
      _
    // Predicated region
    $region42: #{vicreg_loss.1} parent=1 // pred_check
      _
    $region43: #{vicreg_loss.1} parent=1 // pred_check_branch
      %852 = sbr.rel (0) target = $region45
    $region44: #{vicreg_loss.1} parent=1 // pred_region
      %853 = dma.done [#allocation16], 16
    $region45: #{vicreg_loss.1} parent=1 // pred_fallthru
      _
    // Predicated region
    $region46: #{vicreg_loss.1} parent=1 // pred_check
      _
    $region47: #{vicreg_loss.1} parent=1 // pred_check_branch
      %855 = sbr.rel (0) target = $region49
    $region48: #{vicreg_loss.1} parent=1 // pred_region
      %856 = dma.done [#allocation16], 16
    $region49: #{vicreg_loss.1} parent=1 // pred_fallthru
      _
    %857 = vsyncpa [#allocation10], 1
    %858 = vsyncpa [#allocation13], 1
    %859 = vsyncpa [#allocation11], 1
    %860 = vsyncpa [#allocation16], 1

</llo_original>
